<compile_context>
chip_gen: v6e
topology: v6e:2x2x1
jax: 0.10.0
libtpu: 0.0.40
codegen_flags: <defaults>
</compile_context>

<pallas_src>
import functools

import jax
import jax.numpy as jnp
import numpy as np
from jax.experimental import pallas as pl
from jax.experimental.pallas import tpu as pltpu


def _round_up(x, m):
    return ((x + m - 1) // m) * m


# ---------------------------------------------------------------------------
# Pallas kernel: Flatten-ed features -> Linear(H)+ReLU -> fused MoL head.
# ---------------------------------------------------------------------------
def _mln_tail_kernel(k, y_dim, sig_min, sig_max,
                     f_ref, wh_ref, bh_ref, whd_ref, bhd_ref, out_ref):
    # Hidden Linear + ReLU (bf16 inputs, f32 accumulation on the MXU).
    h = jnp.dot(f_ref[...], wh_ref[...], preferred_element_type=jnp.float32)
    h = jnp.maximum(h + bh_ref[...], 0.0)

    # Single fused head matmul: lanes are [pi(k) | mu(k*y_dim) | sigma(k) | 0-pad].
    z = jnp.dot(h.astype(whd_ref.dtype), whd_ref[...],
                preferred_element_type=jnp.float32) + bhd_ref[...]

    n_mu = k * y_dim
    col = jax.lax.broadcasted_iota(jnp.int32, z.shape, 1)
    pi_mask = col < k
    mu_mask = (col >= k) & (col < k + n_mu)
    sg_mask = (col >= k + n_mu) & (col < 2 * k + n_mu)

    # Masked softmax over the k mixture logits (lane-dense, no narrow slices).
    logit = jnp.where(pi_mask, z, -jnp.inf)
    m = jnp.max(logit, axis=1, keepdims=True)
    e = jnp.where(pi_mask, jnp.exp(logit - m), 0.0)
    denom = jnp.sum(e, axis=1, keepdims=True)          # >= 1, well conditioned
    pi = e / denom                                     # exact divide: pi sums to 1

    # Sigma squashing on a masked copy of z so exp() cannot overflow on the mu
    # lanes.  Epilogue VPU/EUP work is filler under the HBM-bound feature DMA,
    # so no effort is spent trimming the dead lanes.
    z_sg = jnp.where(sg_mask, z, 0.0)
    if sig_max is None:
        sg = sig_min + jnp.exp(z_sg)
    else:
        sg = sig_min + (sig_max - sig_min) * jax.nn.sigmoid(z_sg)

    out_ref[...] = jnp.where(pi_mask, pi,
                             jnp.where(sg_mask, sg,
                                       jnp.where(mu_mask, z, 0.0)))


# ---------------------------------------------------------------------------
# Tiling helpers.
# ---------------------------------------------------------------------------
def _vmem_capacity_bytes(default=64 << 20):
    """Physical VMEM per TensorCore; conservative 64 MiB (v7x) if unqueryable."""
    try:
        info = pltpu.get_tpu_info()
        cap = getattr(info, "vmem_capacity_bytes", None)
        if cap:
            return int(cap)
    except Exception:
        pass
    return default


def _pick_tile_n(n_rows, row_bytes, vmem_cap_bytes):
    """Rows per grid step for the HBM-bound feature stream.

    Sized by a per-buffer VMEM budget (the feature tile is double-buffered by
    the BlockSpec pipeline): ~10 MiB on 128-MiB-VMEM chips (v5e/v6e), ~5 MiB on
    64-MiB chips (v7x).  Tiles are multiples of 16 (bf16 sublane packing) and at
    least 128 rows (tall MXU tile) whenever N allows.  Small batches run as a
    single grid step (no per-step pipeline overhead); large N naturally yields
    many steps, which is what feeds megacore sharding on v7x.
    """
    budget = (10 << 20) if vmem_cap_bytes >= (96 << 20) else (5 << 20)
    t = budget // max(1, row_bytes)
    t = max(128, min(2048, t))
    t = (t // 16) * 16
    if n_rows <= t:
        return max(16, _round_up(n_rows, 16))
    return t


# ---------------------------------------------------------------------------
# Dense tail wrapper: features [N, F] -> {'pi','mu','sigma'} via one kernel.
# ---------------------------------------------------------------------------
def mln_dense_tail(features, params, *, k, y_dim, sig_min, sig_max,
                   tile_n=None, matmul_dtype=jnp.bfloat16):
    N, F = features.shape
    H = params["w_h"].shape[1]
    head_out = 2 * k + k * y_dim
    P = _round_up(head_out, 128)       # lane-dense output slab (>= 128 lanes)
    F_pad = _round_up(F, 128)          # lane-aligned feature rows

    # Fuse the three head projections into one [H, P] weight (pi | mu | sigma | 0).
    w_head = jnp.concatenate([params["w_pi"], params["w_mu"], params["w_sg"]], axis=1)
    b_head = jnp.concatenate([params["b_pi"], params["b_mu"], params["b_sg"]], axis=1)
    w_head = jnp.pad(w_head, ((0, 0), (0, P - head_out))).astype(matmul_dtype)
    b_head = jnp.pad(b_head, ((0, 0), (0, P - head_out))).astype(jnp.float32)

    # bf16 matmul inputs (halves the HBM feature stream, native MXU rate);
    # zero rows in w_h match the zero-padded feature columns (exact).
    w_h = jnp.pad(params["w_h"].astype(matmul_dtype), ((0, F_pad - F), (0, 0)))
    b_h = params["b_h"].astype(jnp.float32)

    itm = jnp.dtype(matmul_dtype).itemsize
    vmem_cap = _vmem_capacity_bytes()
    if tile_n is None:
        tile_n = _pick_tile_n(N, F_pad * itm, vmem_cap)
    assert tile_n % 8 == 0, "tile_n must be a multiple of 8"

    n_steps = pl.cdiv(N, tile_n)
    N_pad = n_steps * tile_n           # zero-row padding; sliced off below

    f = jnp.pad(features.astype(matmul_dtype),
                ((0, N_pad - N), (0, F_pad - F)))

    # Scoped-VMEM estimate (double-buffered feature/output tiles + weights).
    est = (2 * tile_n * (F_pad * itm + P * 4)
           + 2 * (F_pad * H + H * P) * itm
           + 2 * (H + P) * 4)
    vmem_limit = None
    if est > (12 << 20):               # above the smallest scoped default (v5e)
        vmem_limit = int(min(est + (16 << 20), vmem_cap - (8 << 20)))

    kernel = functools.partial(_mln_tail_kernel, k, y_dim, sig_min, sig_max)

    slab = pl.pallas_call(
        kernel,
        out_shape=jax.ShapeDtypeStruct((N_pad, P), jnp.float32),
        grid_spec=pltpu.PrefetchScalarGridSpec(
            num_scalar_prefetch=0,
            grid=(n_steps,),
            in_specs=[
                pl.BlockSpec((tile_n, F_pad), lambda i: (i, 0)),  # feature tile
                pl.BlockSpec((F_pad, H), lambda i: (0, 0)),       # hidden weight (loop-invariant)
                pl.BlockSpec((1, H), lambda i: (0, 0)),           # hidden bias
                pl.BlockSpec((H, P), lambda i: (0, 0)),           # fused head weight
                pl.BlockSpec((1, P), lambda i: (0, 0)),           # fused head bias
            ],
            out_specs=pl.BlockSpec((tile_n, P), lambda i: (i, 0)),
        ),
        compiler_params=pltpu.CompilerParams(
            dimension_semantics=("parallel",),
            vmem_limit_bytes=vmem_limit),
    )(f, w_h, b_h, w_head, b_head)

    # Layout glue only: drop padded rows, split the slab, broadcast shared sigma.
    slab = slab[:N]
    pi = slab[:, :k]
    mu = slab[:, k:k + k * y_dim].reshape(N, k, y_dim)
    sg = slab[:, k + k * y_dim:head_out]
    sigma = jnp.broadcast_to(sg[:, :, None], (N, k, y_dim))
    return {"pi": pi, "mu": mu, "sigma": sigma}


# ---------------------------------------------------------------------------
# Convolutional front-end (plain JAX) + full-network forward.
# ---------------------------------------------------------------------------
def conv_frontend(x, conv_params, *, p_sizes, bn_eps=1e-5, out_dtype=jnp.bfloat16):
    """Conv2d -> BatchNorm2d(eval) -> ReLU -> MaxPool2d -> Dropout2d(identity), then Flatten.

    # TODO(synk): the conv/BN/pool front-end is left to XLA (no Pallas conv kernel);
    # BatchNorm uses eval-mode running statistics and Dropout2d is an inference
    # identity — training-mode batch statistics / dropout masks are not modeled.
    """
    for layer, p in zip(conv_params, p_sizes):
        x = jax.lax.conv_general_dilated(
            x, layer["w"], window_strides=(1, 1), padding="SAME",
            dimension_numbers=("NCHW", "OIHW", "NCHW"))
        x = x + layer["b"][None, :, None, None]
        inv = layer["gamma"] * jax.lax.rsqrt(layer["var"] + bn_eps)
        x = x * inv[None, :, None, None] \
            + (layer["beta"] - layer["mean"] * inv)[None, :, None, None]
        x = jnp.maximum(x, 0.0)                              # ReLU
        x = jax.lax.reduce_window(                           # MaxPool2d(p, p)
            x, -jnp.inf, jax.lax.max,
            window_dimensions=(1, 1, p, p),
            window_strides=(1, 1, p, p),
            padding="VALID")
    # Materialize the flattened features directly in the matmul dtype so the
    # dominant HBM stream into the Pallas kernel is half-width.
    return x.astype(out_dtype).reshape(x.shape[0], -1)       # nn.Flatten


def mln_cnn_forward(x, params, *, p_sizes=(2, 2), k=5, y_dim=10,
                    sig_min=1e-4, sig_max=10.0, tile_n=None,
                    matmul_dtype=jnp.bfloat16):
    # TODO(synk): only the default single hidden FC layer (h_dims=[128]) is fused
    # into the Pallas dense-tail kernel; extra h_dims would need another matmul stage.
    feats = conv_frontend(x, params["conv"], p_sizes=p_sizes, out_dtype=matmul_dtype)
    return mln_dense_tail(feats, params, k=k, y_dim=y_dim,
                          sig_min=sig_min, sig_max=sig_max,
                          tile_n=tile_n, matmul_dtype=matmul_dtype)


# ---------------------------------------------------------------------------
# Parameter init (mimics the PyTorch init_param) and pure-JAX references.
# ---------------------------------------------------------------------------
def init_params(key, *, x_dim=(1, 28, 28), k_size=3, c_dims=(32, 64),
                p_sizes=(2, 2), h_dim=128, y_dim=10, k=5,
                mu_min=-3.0, mu_max=3.0):
    keys = iter(jax.random.split(key, 16))
    conv = []
    prev_c = x_dim[0]
    for c in c_dims:
        fan_in = prev_c * k_size * k_size
        w = jax.random.normal(next(keys), (c, prev_c, k_size, k_size),
                              jnp.float32) * np.sqrt(2.0 / fan_in)
        conv.append({
            "w": w,
            "b": jnp.zeros((c,), jnp.float32),
            "gamma": jnp.ones((c,), jnp.float32),
            "beta": jnp.zeros((c,), jnp.float32),
            "mean": jnp.zeros((c,), jnp.float32),
            "var": jnp.ones((c,), jnp.float32),
        })
        prev_c = c
    p_prod = int(np.prod(p_sizes))
    feat = prev_c * (x_dim[1] // p_prod) * (x_dim[2] // p_prod)

    # Linear weights stored transposed as [in, out]; kaiming-style scale, zero bias.
    w_h = jax.random.normal(next(keys), (feat, h_dim), jnp.float32) * np.sqrt(2.0 / feat)
    b_h = jnp.zeros((1, h_dim), jnp.float32)
    w_pi = jax.random.normal(next(keys), (h_dim, k), jnp.float32) * np.sqrt(2.0 / h_dim)
    b_pi = jnp.zeros((1, k), jnp.float32)
    w_mu = jax.random.normal(next(keys), (h_dim, k * y_dim), jnp.float32) * np.sqrt(2.0 / h_dim)
    b_mu = jax.random.uniform(next(keys), (1, k * y_dim), jnp.float32, mu_min, mu_max)
    w_sg = jax.random.normal(next(keys), (h_dim, k), jnp.float32) * np.sqrt(2.0 / h_dim)
    b_sg = jnp.zeros((1, k), jnp.float32)
    return {"conv": conv, "w_h": w_h, "b_h": b_h,
            "w_pi": w_pi, "b_pi": b_pi, "w_mu": w_mu, "b_mu": b_mu,
            "w_sg": w_sg, "b_sg": b_sg}


def _reference_tail(features, params, *, k, y_dim, sig_min, sig_max,
                    matmul_dtype=jnp.bfloat16):
    """Pure-JAX dense tail on the SAME feature matrix as the Pallas kernel."""
    f = features.astype(matmul_dtype)
    h = jnp.dot(f, params["w_h"].astype(matmul_dtype),
                preferred_element_type=jnp.float32) + params["b_h"]
    h = jnp.maximum(h, 0.0).astype(matmul_dtype)

    def proj(w, b):
        return jnp.dot(h, w.astype(matmul_dtype),
                       preferred_element_type=jnp.float32) + b

    pi = jax.nn.softmax(proj(params["w_pi"], params["b_pi"]), axis=1)
    mu = proj(params["w_mu"], params["b_mu"]).reshape(-1, k, y_dim)
    sg = proj(params["w_sg"], params["b_sg"])
    sg = jnp.broadcast_to(sg[:, :, None], mu.shape)
    if sig_max is None:
        sg = sig_min + jnp.exp(sg)
    else:
        sg = sig_min + (sig_max - sig_min) * jax.nn.sigmoid(sg)
    return {"pi": pi, "mu": mu, "sigma": sg}


# ---------------------------------------------------------------------------
if __name__ == "__main__":
    # Module defaults: x_dim=[1,28,28], c_dims=[32,64], p_sizes=[2,2], h_dims=[128],
    # y_dim=10, k=5, sig_min=1e-4, sig_max=10, SHARE_SIG=True.
    N = 32
    k, y_dim = 5, 10
    sig_min, sig_max = 1e-4, 10.0
    p_sizes = (2, 2)

    key = jax.random.PRNGKey(0)
    kx, kp = jax.random.split(key)
    x = jax.random.normal(kx, (N, 1, 28, 28), dtype=jnp.float32)
    params = init_params(kp, x_dim=(1, 28, 28), k=k, y_dim=y_dim)

    # Full forward (conv front-end + Pallas dense tail).
    fwd = jax.jit(functools.partial(
        mln_cnn_forward, p_sizes=p_sizes, k=k, y_dim=y_dim,
        sig_min=sig_min, sig_max=sig_max))
    out = fwd(x, params)
    jax.block_until_ready(out)

    assert out["pi"].shape == (N, k)
    assert out["mu"].shape == (N, k, y_dim)
    assert out["sigma"].shape == (N, k, y_dim)
    for name in ("pi", "mu", "sigma"):
        assert bool(jnp.all(jnp.isfinite(out[name]))), f"non-finite values in {name}"
    assert bool(jnp.all(out["sigma"] >= sig_min))
    np.testing.assert_allclose(np.asarray(jnp.sum(out["pi"], axis=1)),
                               np.ones((N,), np.float32), rtol=1e-4, atol=1e-4)

    # Numerics: compare the Pallas dense tail against the pure-JAX tail on the
    # SAME bf16 feature matrix (single conv evaluation shared by both paths),
    # so the check isolates the kernel from conv-fusion/precision differences.
    conv_fn = jax.jit(functools.partial(conv_frontend, p_sizes=p_sizes))
    feats = jax.block_until_ready(conv_fn(x, params["conv"]))

    tail = jax.jit(functools.partial(
        mln_dense_tail, k=k, y_dim=y_dim, sig_min=sig_min, sig_max=sig_max))
    out_tail = jax.block_until_ready(tail(feats, params))
    ref_tail = _reference_tail(feats, params, k=k, y_dim=y_dim,
                               sig_min=sig_min, sig_max=sig_max)

    # Both paths use identical bf16 inputs with f32 accumulation, so residual
    # differences are accumulation-order / rounding-tie level only.
    for name in ("pi", "mu", "sigma"):
        np.testing.assert_allclose(np.asarray(out_tail[name]),
                                   np.asarray(ref_tail[name]),
                                   rtol=2e-2, atol=2e-2)
    print("KERNEL_OK")
</pallas_src>

<mosaic_0001>
module attributes {stable_mosaic.version = 11 : i64} {
  func.func @_mln_tail_kernel(%arg0: i32, %arg1: memref<32x3200xbf16, #tpu.memory_space<vmem>>, %arg2: memref<3200x128xbf16, #tpu.memory_space<vmem>>, %arg3: memref<1x128xf32, #tpu.memory_space<vmem>>, %arg4: memref<128x128xbf16, #tpu.memory_space<vmem>>, %arg5: memref<1x128xf32, #tpu.memory_space<vmem>>, %arg6: memref<32x128xf32, #tpu.memory_space<vmem>>) attributes {dimension_semantics = [#tpu.dimension_semantics<parallel>], iteration_bounds = array<i64: 1>, scalar_prefetch = 0 : i64, scratch_operands = 0 : i64, tpu.core_type = #tpu.core_type<tc>, window_params = [{transform_indices = @transform_0, window_bounds = array<i64: 32, 3200>}, {pipeline_mode = #tpu.pipeline_mode<synchronous>, transform_indices = @transform_1, window_bounds = array<i64: 3200, 128>}, {pipeline_mode = #tpu.pipeline_mode<synchronous>, transform_indices = @transform_2, window_bounds = array<i64: 1, 128>}, {pipeline_mode = #tpu.pipeline_mode<synchronous>, transform_indices = @transform_3, window_bounds = array<i64: 128, 128>}, {pipeline_mode = #tpu.pipeline_mode<synchronous>, transform_indices = @transform_4, window_bounds = array<i64: 1, 128>}, {transform_indices = @transform_5, window_bounds = array<i64: 32, 128>}]} {
    %c0 = arith.constant 0 : index
    %c0_0 = arith.constant 0 : index
    %0 = vector.load %arg1[%c0, %c0_0] : memref<32x3200xbf16, #tpu.memory_space<vmem>>, vector<32x3200xbf16>
    %c0_1 = arith.constant 0 : index
    %c0_2 = arith.constant 0 : index
    %1 = vector.load %arg2[%c0_1, %c0_2] : memref<3200x128xbf16, #tpu.memory_space<vmem>>, vector<3200x128xbf16>
    %cst = arith.constant dense<0.000000e+00> : vector<32x128xf32>
    %2 = tpu.matmul %0, %1, %cst {dimension_numbers = #tpu.dot_dimension_numbers<[1], [0], [0], [1], [0, 0, 1, 1], [], []>} : vector<32x3200xbf16>, vector<3200x128xbf16>, vector<32x128xf32> -> vector<32x128xf32>
    %c0_3 = arith.constant 0 : index
    %c0_4 = arith.constant 0 : index
    %3 = vector.load %arg3[%c0_3, %c0_4] : memref<1x128xf32, #tpu.memory_space<vmem>>, vector<1x128xf32>
    %4 = vector.broadcast %3 : vector<1x128xf32> to vector<32x128xf32>
    %5 = arith.addf %2, %4 : vector<32x128xf32>
    %cst_5 = arith.constant 0.000000e+00 : f32
    %6 = vector.broadcast %cst_5 : f32 to vector<32x128xf32>
    %7 = arith.maximumf %5, %6 : vector<32x128xf32>
    %8 = arith.truncf %7 : vector<32x128xf32> to vector<32x128xbf16>
    %c0_6 = arith.constant 0 : index
    %c0_7 = arith.constant 0 : index
    %9 = vector.load %arg4[%c0_6, %c0_7] : memref<128x128xbf16, #tpu.memory_space<vmem>>, vector<128x128xbf16>
    %cst_8 = arith.constant dense<0.000000e+00> : vector<32x128xf32>
    %10 = tpu.matmul %8, %9, %cst_8 {dimension_numbers = #tpu.dot_dimension_numbers<[1], [0], [0], [1], [0, 0, 1, 1], [], []>} : vector<32x128xbf16>, vector<128x128xbf16>, vector<32x128xf32> -> vector<32x128xf32>
    %c0_9 = arith.constant 0 : index
    %c0_10 = arith.constant 0 : index
    %11 = vector.load %arg5[%c0_9, %c0_10] : memref<1x128xf32, #tpu.memory_space<vmem>>, vector<1x128xf32>
    %12 = vector.broadcast %11 : vector<1x128xf32> to vector<32x128xf32>
    %13 = arith.addf %10, %12 : vector<32x128xf32>
    %14 = tpu.iota {dimensions = array<i32: 1>} : vector<32x128xi32>
    %c5_i32 = arith.constant 5 : i32
    %15 = vector.broadcast %c5_i32 : i32 to vector<32x128xi32>
    %16 = arith.cmpi slt, %14, %15 : vector<32x128xi32>
    %c5_i32_11 = arith.constant 5 : i32
    %17 = vector.broadcast %c5_i32_11 : i32 to vector<32x128xi32>
    %18 = arith.cmpi sge, %14, %17 : vector<32x128xi32>
    %c55_i32 = arith.constant 55 : i32
    %19 = vector.broadcast %c55_i32 : i32 to vector<32x128xi32>
    %20 = arith.cmpi slt, %14, %19 : vector<32x128xi32>
    %21 = arith.andi %18, %20 : vector<32x128xi1>
    %c55_i32_12 = arith.constant 55 : i32
    %22 = vector.broadcast %c55_i32_12 : i32 to vector<32x128xi32>
    %23 = arith.cmpi sge, %14, %22 : vector<32x128xi32>
    %c60_i32 = arith.constant 60 : i32
    %24 = vector.broadcast %c60_i32 : i32 to vector<32x128xi32>
    %25 = arith.cmpi slt, %14, %24 : vector<32x128xi32>
    %26 = arith.andi %23, %25 : vector<32x128xi1>
    %cst_13 = arith.constant 0xFF800000 : f32
    %27 = vector.broadcast %cst_13 : f32 to vector<32x128xf32>
    %28 = arith.select %16, %13, %27 : vector<32x128xi1>, vector<32x128xf32>
    %cst_14 = arith.constant dense<0xFF800000> : vector<32xf32>
    %29 = vector.multi_reduction <maximumf>, %28, %cst_14 [1] : vector<32x128xf32> to vector<32xf32>
    %30 = vector.shape_cast %29 : vector<32xf32> to vector<32x1xf32>
    %31 = vector.broadcast %30 : vector<32x1xf32> to vector<32x128xf32>
    %32 = arith.subf %28, %31 : vector<32x128xf32>
    %33 = math.exp %32 : vector<32x128xf32>
    %cst_15 = arith.constant 0.000000e+00 : f32
    %34 = vector.broadcast %cst_15 : f32 to vector<32x128xf32>
    %35 = arith.select %16, %33, %34 : vector<32x128xi1>, vector<32x128xf32>
    %cst_16 = arith.constant dense<0.000000e+00> : vector<32xf32>
    %36 = vector.multi_reduction <add>, %35, %cst_16 [1] : vector<32x128xf32> to vector<32xf32>
    %37 = vector.shape_cast %36 : vector<32xf32> to vector<32x1xf32>
    %38 = vector.broadcast %37 : vector<32x1xf32> to vector<32x128xf32>
    %39 = arith.divf %35, %38 : vector<32x128xf32>
    %cst_17 = arith.constant 0.000000e+00 : f32
    %40 = vector.broadcast %cst_17 : f32 to vector<32x128xf32>
    %41 = arith.select %26, %13, %40 : vector<32x128xi1>, vector<32x128xf32>
    %42 = arith.negf %41 : vector<32x128xf32>
    %43 = math.exp %42 : vector<32x128xf32>
    %cst_18 = arith.constant 1.000000e+00 : f32
    %44 = vector.broadcast %cst_18 : f32 to vector<32x128xf32>
    %45 = arith.addf %44, %43 : vector<32x128xf32>
    %46 = arith.divf %44, %45 : vector<32x128xf32>
    %cst_19 = arith.constant 9.99989986 : f32
    %47 = vector.broadcast %cst_19 : f32 to vector<32x128xf32>
    %48 = arith.mulf %47, %46 : vector<32x128xf32>
    %cst_20 = arith.constant 9.99999974E-5 : f32
    %49 = vector.broadcast %cst_20 : f32 to vector<32x128xf32>
    %50 = arith.addf %49, %48 : vector<32x128xf32>
    %cst_21 = arith.constant 0.000000e+00 : f32
    %51 = vector.broadcast %cst_21 : f32 to vector<32x128xf32>
    %52 = arith.select %21, %13, %51 : vector<32x128xi1>, vector<32x128xf32>
    %53 = arith.select %26, %50, %52 : vector<32x128xi1>, vector<32x128xf32>
    %54 = arith.select %16, %39, %53 : vector<32x128xi1>, vector<32x128xf32>
    %c0_22 = arith.constant 0 : index
    %c0_23 = arith.constant 0 : index
    %55 = vector.load %arg6[%c0_22, %c0_23] : memref<32x128xf32, #tpu.memory_space<vmem>>, vector<32x128xf32>
    tpu.vector_store %arg6[%c0_22, %c0_23], %54 {strides = array<i32>} : memref<32x128xf32, #tpu.memory_space<vmem>>, vector<32x128xf32>,
    return
  }
  func.func @transform_0(%arg0: i32) -> (i32, i32) {
    %c0_i32 = arith.constant 0 : i32
    %c0_i32_0 = arith.constant 0 : i32
    return %arg0, %c0_i32 : i32, i32
  }
  func.func @transform_1(%arg0: i32) -> (i32, i32) {
    %c0_i32 = arith.constant 0 : i32
    %c0_i32_0 = arith.constant 0 : i32
    %c0_i32_1 = arith.constant 0 : i32
    return %c0_i32, %c0_i32_0 : i32, i32
  }
  func.func @transform_2(%arg0: i32) -> (i32, i32) {
    %c0_i32 = arith.constant 0 : i32
    %c0_i32_0 = arith.constant 0 : i32
    %c0_i32_1 = arith.constant 0 : i32
    return %c0_i32, %c0_i32_0 : i32, i32
  }
  func.func @transform_3(%arg0: i32) -> (i32, i32) {
    %c0_i32 = arith.constant 0 : i32
    %c0_i32_0 = arith.constant 0 : i32
    %c0_i32_1 = arith.constant 0 : i32
    return %c0_i32, %c0_i32_0 : i32, i32
  }
  func.func @transform_4(%arg0: i32) -> (i32, i32) {
    %c0_i32 = arith.constant 0 : i32
    %c0_i32_0 = arith.constant 0 : i32
    %c0_i32_1 = arith.constant 0 : i32
    return %c0_i32, %c0_i32_0 : i32, i32
  }
  func.func @transform_5(%arg0: i32) -> (i32, i32) {
    %c0_i32 = arith.constant 0 : i32
    %c0_i32_0 = arith.constant 0 : i32
    return %arg0, %c0_i32 : i32, i32
  }
}

</mosaic_0001>

<llo_original>
// kernel: mln_cnn_forward.1
$region0: #{mln_cnn_forward.1}
  #allocation0 [shape = 'u32[]', space=smem, size = 0x4, offset = 0x4, fixed_abs, tag = 'smem constant byte address 0x4 - core index']
  #allocation1 [shape = 'u32[144,128]{1,0:T(1,128)}', space=vmem, size = 0x12000, scoped, tag = 'internal scratch']
  %s0 = inlined_call_operand.vmem [shape: bf16[32,3200], index: 0, kind: input, shape index: {}]
  %s1 = inlined_call_operand.vmem [shape: bf16[3200,128], index: 1, kind: input, shape index: {}]
  %s2 = inlined_call_operand.vmem [shape: f32[1,128], index: 2, kind: input, shape index: {}]
  %s3 = inlined_call_operand.vmem [shape: bf16[128,128], index: 3, kind: input, shape index: {}]
  %s4 = inlined_call_operand.vmem [shape: f32[1,128], index: 4, kind: input, shape index: {}]
  %s5 = inlined_call_operand.vmem [shape: f32[32,128], index: 5, kind: output, shape index: {}]
  %s6 = sld [smem:[#allocation0]]
  $region30: #{mln_cnn_forward.1} parent=0
    _
  %s8 = ssub.s32 1, %s6
  %s9 = scalar_select 0, %s8, %s6
  // Predicated region
  $region2: #{mln_cnn_forward.1} parent=0 // pred_check
    _
  $region3: #{mln_cnn_forward.1} parent=0 // pred_check_branch
    %11 = sbr.rel (0) target = $region5
  $region4: #{mln_cnn_forward.1} parent=0 // pred_region
    _
  $region5: #{mln_cnn_forward.1} parent=0 // pred_fallthru
    _
  // Predicated region
  $region6: #{mln_cnn_forward.1} parent=0 // pred_check
    _
  $region7: #{mln_cnn_forward.1} parent=0 // pred_check_branch
    %13 = sbr.rel (0) target = $region9
  $region8: #{mln_cnn_forward.1} parent=0 // pred_region
    _
  $region9: #{mln_cnn_forward.1} parent=0 // pred_fallthru
    _
  // Predicated region
  $region10: #{mln_cnn_forward.1} parent=0 // pred_check
    _
  $region11: #{mln_cnn_forward.1} parent=0 // pred_check_branch
    %15 = sbr.rel (0) target = $region13
  $region12: #{mln_cnn_forward.1} parent=0 // pred_region
    _
  $region13: #{mln_cnn_forward.1} parent=0 // pred_fallthru
    _
  // Predicated region
  $region14: #{mln_cnn_forward.1} parent=0 // pred_check
    _
  $region15: #{mln_cnn_forward.1} parent=0 // pred_check_branch
    %17 = sbr.rel (0) target = $region17
  $region16: #{mln_cnn_forward.1} parent=0 // pred_region
    _
  $region17: #{mln_cnn_forward.1} parent=0 // pred_fallthru
    _
  // Predicated region
  $region18: #{mln_cnn_forward.1} parent=0 // pred_check
    _
  $region19: #{mln_cnn_forward.1} parent=0 // pred_check_branch
    %19 = sbr.rel (0) target = $region21
  $region20: #{mln_cnn_forward.1} parent=0 // pred_region
    _
  $region21: #{mln_cnn_forward.1} parent=0 // pred_fallthru
    _
  %v21 = vld [vmem:[%s0] sm:$0xff]
  %v22 = vld [vmem:[%s0 + $0x8] sm:$0xff]
  %v23 = vld [vmem:[%s0 + $0x10] sm:$0xff]
  %v24 = vld [vmem:[%s0 + $0x18] sm:$0xff]
  %v25 = vld [vmem:[%s0 + $0x20] sm:$0xff]
  %v26 = vld [vmem:[%s0 + $0x28] sm:$0xff]
  %v27 = vld [vmem:[%s0 + $0x30] sm:$0xff]
  %v28 = vld [vmem:[%s0 + $0x38] sm:$0xff]
  %v29 = vld [vmem:[%s0 + $0x40] sm:$0xff]
  %v30 = vld [vmem:[%s0 + $0x48] sm:$0xff]
  %v31 = vld [vmem:[%s0 + $0x50] sm:$0xff]
  %v32 = vld [vmem:[%s0 + $0x58] sm:$0xff]
  %v33 = vld [vmem:[%s0 + $0x60] sm:$0xf]
  %v34 = vld [vmem:[%s0 + $0x64] sm:$0xff]
  %v35 = vld [vmem:[%s0 + $0x6c] sm:$0xff]
  %v36 = vld [vmem:[%s0 + $0x74] sm:$0xff]
  %v37 = vld [vmem:[%s0 + $0x7c] sm:$0xff]
  %v38 = vld [vmem:[%s0 + $0x84] sm:$0xff]
  %v39 = vld [vmem:[%s0 + $0x8c] sm:$0xff]
  %v40 = vld [vmem:[%s0 + $0x94] sm:$0xff]
  %v41 = vld [vmem:[%s0 + $0x9c] sm:$0xff]
  %v42 = vld [vmem:[%s0 + $0xa4] sm:$0xff]
  %v43 = vld [vmem:[%s0 + $0xac] sm:$0xff]
  %v44 = vld [vmem:[%s0 + $0xb4] sm:$0xff]
  %v45 = vld [vmem:[%s0 + $0xbc] sm:$0xff]
  %v46 = vld [vmem:[%s0 + $0xc4] sm:$0xf]
  %v47 = vld [vmem:[%s0 + $0xc8] sm:$0xff]
  %v48 = vld [vmem:[%s0 + $0xd0] sm:$0xff]
  %v49 = vld [vmem:[%s0 + $0xd8] sm:$0xff]
  %v50 = vld [vmem:[%s0 + $0xe0] sm:$0xff]
  %v51 = vld [vmem:[%s0 + $0xe8] sm:$0xff]
  %v52 = vld [vmem:[%s0 + $0xf0] sm:$0xff]
  %v53 = vld [vmem:[%s0 + $0xf8] sm:$0xff]
  %v54 = vld [vmem:[%s0 + $0x100] sm:$0xff]
  %v55 = vld [vmem:[%s0 + $0x108] sm:$0xff]
  %v56 = vld [vmem:[%s0 + $0x110] sm:$0xff]
  %v57 = vld [vmem:[%s0 + $0x118] sm:$0xff]
  %v58 = vld [vmem:[%s0 + $0x120] sm:$0xff]
  %v59 = vld [vmem:[%s0 + $0x128] sm:$0xf]
  %v60 = vld [vmem:[%s0 + $0x12c] sm:$0xff]
  %v61 = vld [vmem:[%s0 + $0x134] sm:$0xff]
  %v62 = vld [vmem:[%s0 + $0x13c] sm:$0xff]
  %v63 = vld [vmem:[%s0 + $0x144] sm:$0xff]
  %v64 = vld [vmem:[%s0 + $0x14c] sm:$0xff]
  %v65 = vld [vmem:[%s0 + $0x154] sm:$0xff]
  %v66 = vld [vmem:[%s0 + $0x15c] sm:$0xff]
  %v67 = vld [vmem:[%s0 + $0x164] sm:$0xff]
  %v68 = vld [vmem:[%s0 + $0x16c] sm:$0xff]
  %v69 = vld [vmem:[%s0 + $0x174] sm:$0xff]
  %v70 = vld [vmem:[%s0 + $0x17c] sm:$0xff]
  %v71 = vld [vmem:[%s0 + $0x184] sm:$0xff]
  %v72 = vld [vmem:[%s0 + $0x18c] sm:$0xf]
  %v73 = vld [vmem:[%s1] sm:$0xf]
  %v74 = vld [vmem:[%s1 + $0x4] sm:$0xf]
  %v75 = vld [vmem:[%s1 + $0x8] sm:$0xf]
  %v76 = vld [vmem:[%s1 + $0xc] sm:$0xf]
  %v77 = vld [vmem:[%s1 + $0x10] sm:$0xf]
  %v78 = vld [vmem:[%s1 + $0x14] sm:$0xf]
  %v79 = vld [vmem:[%s1 + $0x18] sm:$0xf]
  %v80 = vld [vmem:[%s1 + $0x1c] sm:$0xf]
  %v81 = vld [vmem:[%s1 + $0x20] sm:$0xf]
  %v82 = vld [vmem:[%s1 + $0x24] sm:$0xf]
  %v83 = vld [vmem:[%s1 + $0x28] sm:$0xf]
  %v84 = vld [vmem:[%s1 + $0x2c] sm:$0xf]
  %v85 = vld [vmem:[%s1 + $0x30] sm:$0xf]
  %v86 = vld [vmem:[%s1 + $0x34] sm:$0xf]
  %v87 = vld [vmem:[%s1 + $0x38] sm:$0xf]
  %v88 = vld [vmem:[%s1 + $0x3c] sm:$0xf]
  %v89 = vld [vmem:[%s1 + $0x40] sm:$0xf]
  %v90 = vld [vmem:[%s1 + $0x44] sm:$0xf]
  %v91 = vld [vmem:[%s1 + $0x48] sm:$0xf]
  %v92 = vld [vmem:[%s1 + $0x4c] sm:$0xf]
  %v93 = vld [vmem:[%s1 + $0x50] sm:$0xf]
  %v94 = vld [vmem:[%s1 + $0x54] sm:$0xf]
  %v95 = vld [vmem:[%s1 + $0x58] sm:$0xf]
  %v96 = vld [vmem:[%s1 + $0x5c] sm:$0xf]
  %v97 = vld [vmem:[%s1 + $0x60] sm:$0xf]
  %v98 = vld [vmem:[%s1 + $0x64] sm:$0xf]
  %v99 = vld [vmem:[%s1 + $0x68] sm:$0xf]
  %v100 = vld [vmem:[%s1 + $0x6c] sm:$0xf]
  %v101 = vld [vmem:[%s1 + $0x70] sm:$0xf]
  %v102 = vld [vmem:[%s1 + $0x74] sm:$0xf]
  %v103 = vld [vmem:[%s1 + $0x78] sm:$0xf]
  %v104 = vld [vmem:[%s1 + $0x7c] sm:$0xf]
  %v105 = vld [vmem:[%s1 + $0x80] sm:$0xf]
  %v106 = vld [vmem:[%s1 + $0x84] sm:$0xf]
  %v107 = vld [vmem:[%s1 + $0x88] sm:$0xf]
  %v108 = vld [vmem:[%s1 + $0x8c] sm:$0xf]
  %v109 = vld [vmem:[%s1 + $0x90] sm:$0xf]
  %v110 = vld [vmem:[%s1 + $0x94] sm:$0xf]
  %v111 = vld [vmem:[%s1 + $0x98] sm:$0xf]
  %v112 = vld [vmem:[%s1 + $0x9c] sm:$0xf]
  %v113 = vld [vmem:[%s1 + $0xa0] sm:$0xf]
  %v114 = vld [vmem:[%s1 + $0xa4] sm:$0xf]
  %v115 = vld [vmem:[%s1 + $0xa8] sm:$0xf]
  %v116 = vld [vmem:[%s1 + $0xac] sm:$0xf]
  %v117 = vld [vmem:[%s1 + $0xb0] sm:$0xf]
  %v118 = vld [vmem:[%s1 + $0xb4] sm:$0xf]
  %v119 = vld [vmem:[%s1 + $0xb8] sm:$0xf]
  %v120 = vld [vmem:[%s1 + $0xbc] sm:$0xf]
  %v121 = vld [vmem:[%s1 + $0xc0] sm:$0xf]
  %v122 = vld [vmem:[%s1 + $0xc4] sm:$0xf]
  %v123 = vld [vmem:[%s1 + $0xc8] sm:$0xf]
  %v124 = vld [vmem:[%s1 + $0xcc] sm:$0xf]
  %v125 = vld [vmem:[%s1 + $0xd0] sm:$0xf]
  %v126 = vld [vmem:[%s1 + $0xd4] sm:$0xf]
  %v127 = vld [vmem:[%s1 + $0xd8] sm:$0xf]
  %v128 = vld [vmem:[%s1 + $0xdc] sm:$0xf]
  %v129 = vld [vmem:[%s1 + $0xe0] sm:$0xf]
  %v130 = vld [vmem:[%s1 + $0xe4] sm:$0xf]
  %v131 = vld [vmem:[%s1 + $0xe8] sm:$0xf]
  %v132 = vld [vmem:[%s1 + $0xec] sm:$0xf]
  %v133 = vld [vmem:[%s1 + $0xf0] sm:$0xf]
  %v134 = vld [vmem:[%s1 + $0xf4] sm:$0xf]
  %v135 = vld [vmem:[%s1 + $0xf8] sm:$0xf]
  %v136 = vld [vmem:[%s1 + $0xfc] sm:$0xf]
  %v137 = vld [vmem:[%s1 + $0x100] sm:$0xf]
  %v138 = vld [vmem:[%s1 + $0x104] sm:$0xf]
  %v139 = vld [vmem:[%s1 + $0x108] sm:$0xf]
  %v140 = vld [vmem:[%s1 + $0x10c] sm:$0xf]
  %v141 = vld [vmem:[%s1 + $0x110] sm:$0xf]
  %v142 = vld [vmem:[%s1 + $0x114] sm:$0xf]
  %v143 = vld [vmem:[%s1 + $0x118] sm:$0xf]
  %v144 = vld [vmem:[%s1 + $0x11c] sm:$0xf]
  %v145 = vld [vmem:[%s1 + $0x120] sm:$0xf]
  %v146 = vld [vmem:[%s1 + $0x124] sm:$0xf]
  %v147 = vld [vmem:[%s1 + $0x128] sm:$0xf]
  %v148 = vld [vmem:[%s1 + $0x12c] sm:$0xf]
  %v149 = vld [vmem:[%s1 + $0x130] sm:$0xf]
  %v150 = vld [vmem:[%s1 + $0x134] sm:$0xf]
  %v151 = vld [vmem:[%s1 + $0x138] sm:$0xf]
  %v152 = vld [vmem:[%s1 + $0x13c] sm:$0xf]
  %v153 = vld [vmem:[%s1 + $0x140] sm:$0xf]
  %v154 = vld [vmem:[%s1 + $0x144] sm:$0xf]
  %v155 = vld [vmem:[%s1 + $0x148] sm:$0xf]
  %v156 = vld [vmem:[%s1 + $0x14c] sm:$0xf]
  %v157 = vld [vmem:[%s1 + $0x150] sm:$0xf]
  %v158 = vld [vmem:[%s1 + $0x154] sm:$0xf]
  %v159 = vld [vmem:[%s1 + $0x158] sm:$0xf]
  %v160 = vld [vmem:[%s1 + $0x15c] sm:$0xf]
  %v161 = vld [vmem:[%s1 + $0x160] sm:$0xf]
  %v162 = vld [vmem:[%s1 + $0x164] sm:$0xf]
  %v163 = vld [vmem:[%s1 + $0x168] sm:$0xf]
  %v164 = vld [vmem:[%s1 + $0x16c] sm:$0xf]
  %v165 = vld [vmem:[%s1 + $0x170] sm:$0xf]
  %v166 = vld [vmem:[%s1 + $0x174] sm:$0xf]
  %v167 = vld [vmem:[%s1 + $0x178] sm:$0xf]
  %v168 = vld [vmem:[%s1 + $0x17c] sm:$0xf]
  %v169 = vld [vmem:[%s1 + $0x180] sm:$0xf]
  %v170 = vld [vmem:[%s1 + $0x184] sm:$0xf]
  %v171 = vld [vmem:[%s1 + $0x188] sm:$0xf]
  %v172 = vld [vmem:[%s1 + $0x18c] sm:$0xf]
  %v173 = vld [vmem:[%s1 + $0x190] sm:$0xf]
  %v174 = vld [vmem:[%s1 + $0x194] sm:$0xf]
  %v175 = vld [vmem:[%s1 + $0x198] sm:$0xf]
  %v176 = vld [vmem:[%s1 + $0x19c] sm:$0xf]
  %v177 = vld [vmem:[%s1 + $0x1a0] sm:$0xf]
  %v178 = vld [vmem:[%s1 + $0x1a4] sm:$0xf]
  %v179 = vld [vmem:[%s1 + $0x1a8] sm:$0xf]
  %v180 = vld [vmem:[%s1 + $0x1ac] sm:$0xf]
  %v181 = vld [vmem:[%s1 + $0x1b0] sm:$0xf]
  %v182 = vld [vmem:[%s1 + $0x1b4] sm:$0xf]
  %v183 = vld [vmem:[%s1 + $0x1b8] sm:$0xf]
  %v184 = vld [vmem:[%s1 + $0x1bc] sm:$0xf]
  %v185 = vld [vmem:[%s1 + $0x1c0] sm:$0xf]
  %v186 = vld [vmem:[%s1 + $0x1c4] sm:$0xf]
  %v187 = vld [vmem:[%s1 + $0x1c8] sm:$0xf]
  %v188 = vld [vmem:[%s1 + $0x1cc] sm:$0xf]
  %v189 = vld [vmem:[%s1 + $0x1d0] sm:$0xf]
  %v190 = vld [vmem:[%s1 + $0x1d4] sm:$0xf]
  %v191 = vld [vmem:[%s1 + $0x1d8] sm:$0xf]
  %v192 = vld [vmem:[%s1 + $0x1dc] sm:$0xf]
  %v193 = vld [vmem:[%s1 + $0x1e0] sm:$0xf]
  %v194 = vld [vmem:[%s1 + $0x1e4] sm:$0xf]
  %v195 = vld [vmem:[%s1 + $0x1e8] sm:$0xf]
  %v196 = vld [vmem:[%s1 + $0x1ec] sm:$0xf]
  %v197 = vld [vmem:[%s1 + $0x1f0] sm:$0xf]
  %v198 = vld [vmem:[%s1 + $0x1f4] sm:$0xf]
  %v199 = vld [vmem:[%s1 + $0x1f8] sm:$0xf]
  %v200 = vld [vmem:[%s1 + $0x1fc] sm:$0xf]
  %v201 = vld [vmem:[%s1 + $0x200] sm:$0xf]
  %v202 = vld [vmem:[%s1 + $0x204] sm:$0xf]
  %v203 = vld [vmem:[%s1 + $0x208] sm:$0xf]
  %v204 = vld [vmem:[%s1 + $0x20c] sm:$0xf]
  %v205 = vld [vmem:[%s1 + $0x210] sm:$0xf]
  %v206 = vld [vmem:[%s1 + $0x214] sm:$0xf]
  %v207 = vld [vmem:[%s1 + $0x218] sm:$0xf]
  %v208 = vld [vmem:[%s1 + $0x21c] sm:$0xf]
  %v209 = vld [vmem:[%s1 + $0x220] sm:$0xf]
  %v210 = vld [vmem:[%s1 + $0x224] sm:$0xf]
  %v211 = vld [vmem:[%s1 + $0x228] sm:$0xf]
  %v212 = vld [vmem:[%s1 + $0x22c] sm:$0xf]
  %v213 = vld [vmem:[%s1 + $0x230] sm:$0xf]
  %v214 = vld [vmem:[%s1 + $0x234] sm:$0xf]
  %v215 = vld [vmem:[%s1 + $0x238] sm:$0xf]
  %v216 = vld [vmem:[%s1 + $0x23c] sm:$0xf]
  %v217 = vld [vmem:[%s1 + $0x240] sm:$0xf]
  %v218 = vld [vmem:[%s1 + $0x244] sm:$0xf]
  %v219 = vld [vmem:[%s1 + $0x248] sm:$0xf]
  %v220 = vld [vmem:[%s1 + $0x24c] sm:$0xf]
  %v221 = vld [vmem:[%s1 + $0x250] sm:$0xf]
  %v222 = vld [vmem:[%s1 + $0x254] sm:$0xf]
  %v223 = vld [vmem:[%s1 + $0x258] sm:$0xf]
  %v224 = vld [vmem:[%s1 + $0x25c] sm:$0xf]
  %v225 = vld [vmem:[%s1 + $0x260] sm:$0xf]
  %v226 = vld [vmem:[%s1 + $0x264] sm:$0xf]
  %v227 = vld [vmem:[%s1 + $0x268] sm:$0xf]
  %v228 = vld [vmem:[%s1 + $0x26c] sm:$0xf]
  %v229 = vld [vmem:[%s1 + $0x270] sm:$0xf]
  %v230 = vld [vmem:[%s1 + $0x274] sm:$0xf]
  %v231 = vld [vmem:[%s1 + $0x278] sm:$0xf]
  %v232 = vld [vmem:[%s1 + $0x27c] sm:$0xf]
  %v233 = vld [vmem:[%s1 + $0x280] sm:$0xf]
  %v234 = vld [vmem:[%s1 + $0x284] sm:$0xf]
  %v235 = vld [vmem:[%s1 + $0x288] sm:$0xf]
  %v236 = vld [vmem:[%s1 + $0x28c] sm:$0xf]
  %v237 = vld [vmem:[%s1 + $0x290] sm:$0xf]
  %v238 = vld [vmem:[%s1 + $0x294] sm:$0xf]
  %v239 = vld [vmem:[%s1 + $0x298] sm:$0xf]
  %v240 = vld [vmem:[%s1 + $0x29c] sm:$0xf]
  %v241 = vld [vmem:[%s1 + $0x2a0] sm:$0xf]
  %v242 = vld [vmem:[%s1 + $0x2a4] sm:$0xf]
  %v243 = vld [vmem:[%s1 + $0x2a8] sm:$0xf]
  %v244 = vld [vmem:[%s1 + $0x2ac] sm:$0xf]
  %v245 = vld [vmem:[%s1 + $0x2b0] sm:$0xf]
  %v246 = vld [vmem:[%s1 + $0x2b4] sm:$0xf]
  %v247 = vld [vmem:[%s1 + $0x2b8] sm:$0xf]
  %v248 = vld [vmem:[%s1 + $0x2bc] sm:$0xf]
  %v249 = vld [vmem:[%s1 + $0x2c0] sm:$0xf]
  %v250 = vld [vmem:[%s1 + $0x2c4] sm:$0xf]
  %v251 = vld [vmem:[%s1 + $0x2c8] sm:$0xf]
  %v252 = vld [vmem:[%s1 + $0x2cc] sm:$0xf]
  %v253 = vld [vmem:[%s1 + $0x2d0] sm:$0xf]
  %v254 = vld [vmem:[%s1 + $0x2d4] sm:$0xf]
  %v255 = vld [vmem:[%s1 + $0x2d8] sm:$0xf]
  %v256 = vld [vmem:[%s1 + $0x2dc] sm:$0xf]
  %v257 = vld [vmem:[%s1 + $0x2e0] sm:$0xf]
  %v258 = vld [vmem:[%s1 + $0x2e4] sm:$0xf]
  %v259 = vld [vmem:[%s1 + $0x2e8] sm:$0xf]
  %v260 = vld [vmem:[%s1 + $0x2ec] sm:$0xf]
  %v261 = vld [vmem:[%s1 + $0x2f0] sm:$0xf]
  %v262 = vld [vmem:[%s1 + $0x2f4] sm:$0xf]
  %v263 = vld [vmem:[%s1 + $0x2f8] sm:$0xf]
  %v264 = vld [vmem:[%s1 + $0x2fc] sm:$0xf]
  %v265 = vld [vmem:[%s1 + $0x300] sm:$0xf]
  %v266 = vld [vmem:[%s1 + $0x304] sm:$0xf]
  %v267 = vld [vmem:[%s1 + $0x308] sm:$0xf]
  %v268 = vld [vmem:[%s1 + $0x30c] sm:$0xf]
  %v269 = vld [vmem:[%s1 + $0x310] sm:$0xf]
  %v270 = vld [vmem:[%s1 + $0x314] sm:$0xf]
  %v271 = vld [vmem:[%s1 + $0x318] sm:$0xf]
  %v272 = vld [vmem:[%s1 + $0x31c] sm:$0xf]
  %v273 = vld [vmem:[%s1 + $0x320] sm:$0xf]
  %v274 = vld [vmem:[%s1 + $0x324] sm:$0xf]
  %v275 = vld [vmem:[%s1 + $0x328] sm:$0xf]
  %v276 = vld [vmem:[%s1 + $0x32c] sm:$0xf]
  %v277 = vld [vmem:[%s1 + $0x330] sm:$0xf]
  %v278 = vld [vmem:[%s1 + $0x334] sm:$0xf]
  %v279 = vld [vmem:[%s1 + $0x338] sm:$0xf]
  %v280 = vld [vmem:[%s1 + $0x33c] sm:$0xf]
  %v281 = vld [vmem:[%s1 + $0x340] sm:$0xf]
  %v282 = vld [vmem:[%s1 + $0x344] sm:$0xf]
  %v283 = vld [vmem:[%s1 + $0x348] sm:$0xf]
  %v284 = vld [vmem:[%s1 + $0x34c] sm:$0xf]
  %v285 = vld [vmem:[%s1 + $0x350] sm:$0xf]
  %v286 = vld [vmem:[%s1 + $0x354] sm:$0xf]
  %v287 = vld [vmem:[%s1 + $0x358] sm:$0xf]
  %v288 = vld [vmem:[%s1 + $0x35c] sm:$0xf]
  %v289 = vld [vmem:[%s1 + $0x360] sm:$0xf]
  %v290 = vld [vmem:[%s1 + $0x364] sm:$0xf]
  %v291 = vld [vmem:[%s1 + $0x368] sm:$0xf]
  %v292 = vld [vmem:[%s1 + $0x36c] sm:$0xf]
  %v293 = vld [vmem:[%s1 + $0x370] sm:$0xf]
  %v294 = vld [vmem:[%s1 + $0x374] sm:$0xf]
  %v295 = vld [vmem:[%s1 + $0x378] sm:$0xf]
  %v296 = vld [vmem:[%s1 + $0x37c] sm:$0xf]
  %v297 = vld [vmem:[%s1 + $0x380] sm:$0xf]
  %v298 = vld [vmem:[%s1 + $0x384] sm:$0xf]
  %v299 = vld [vmem:[%s1 + $0x388] sm:$0xf]
  %v300 = vld [vmem:[%s1 + $0x38c] sm:$0xf]
  %v301 = vld [vmem:[%s1 + $0x390] sm:$0xf]
  %v302 = vld [vmem:[%s1 + $0x394] sm:$0xf]
  %v303 = vld [vmem:[%s1 + $0x398] sm:$0xf]
  %v304 = vld [vmem:[%s1 + $0x39c] sm:$0xf]
  %v305 = vld [vmem:[%s1 + $0x3a0] sm:$0xf]
  %v306 = vld [vmem:[%s1 + $0x3a4] sm:$0xf]
  %v307 = vld [vmem:[%s1 + $0x3a8] sm:$0xf]
  %v308 = vld [vmem:[%s1 + $0x3ac] sm:$0xf]
  %v309 = vld [vmem:[%s1 + $0x3b0] sm:$0xf]
  %v310 = vld [vmem:[%s1 + $0x3b4] sm:$0xf]
  %v311 = vld [vmem:[%s1 + $0x3b8] sm:$0xf]
  %v312 = vld [vmem:[%s1 + $0x3bc] sm:$0xf]
  %v313 = vld [vmem:[%s1 + $0x3c0] sm:$0xf]
  %v314 = vld [vmem:[%s1 + $0x3c4] sm:$0xf]
  %v315 = vld [vmem:[%s1 + $0x3c8] sm:$0xf]
  %v316 = vld [vmem:[%s1 + $0x3cc] sm:$0xf]
  %v317 = vld [vmem:[%s1 + $0x3d0] sm:$0xf]
  %v318 = vld [vmem:[%s1 + $0x3d4] sm:$0xf]
  %v319 = vld [vmem:[%s1 + $0x3d8] sm:$0xf]
  %v320 = vld [vmem:[%s1 + $0x3dc] sm:$0xf]
  %v321 = vld [vmem:[%s1 + $0x3e0] sm:$0xf]
  %v322 = vld [vmem:[%s1 + $0x3e4] sm:$0xf]
  %v323 = vld [vmem:[%s1 + $0x3e8] sm:$0xf]
  %v324 = vld [vmem:[%s1 + $0x3ec] sm:$0xf]
  %v325 = vld [vmem:[%s1 + $0x3f0] sm:$0xf]
  %v326 = vld [vmem:[%s1 + $0x3f4] sm:$0xf]
  %v327 = vld [vmem:[%s1 + $0x3f8] sm:$0xf]
  %v328 = vld [vmem:[%s1 + $0x3fc] sm:$0xf]
  %v329 = vld [vmem:[%s1 + $0x400] sm:$0xf]
  %v330 = vld [vmem:[%s1 + $0x404] sm:$0xf]
  %v331 = vld [vmem:[%s1 + $0x408] sm:$0xf]
  %v332 = vld [vmem:[%s1 + $0x40c] sm:$0xf]
  %v333 = vld [vmem:[%s1 + $0x410] sm:$0xf]
  %v334 = vld [vmem:[%s1 + $0x414] sm:$0xf]
  %v335 = vld [vmem:[%s1 + $0x418] sm:$0xf]
  %v336 = vld [vmem:[%s1 + $0x41c] sm:$0xf]
  %v337 = vld [vmem:[%s1 + $0x420] sm:$0xf]
  %v338 = vld [vmem:[%s1 + $0x424] sm:$0xf]
  %v339 = vld [vmem:[%s1 + $0x428] sm:$0xf]
  %v340 = vld [vmem:[%s1 + $0x42c] sm:$0xf]
  %v341 = vld [vmem:[%s1 + $0x430] sm:$0xf]
  %v342 = vld [vmem:[%s1 + $0x434] sm:$0xf]
  %v343 = vld [vmem:[%s1 + $0x438] sm:$0xf]
  %v344 = vld [vmem:[%s1 + $0x43c] sm:$0xf]
  %v345 = vld [vmem:[%s1 + $0x440] sm:$0xf]
  %v346 = vld [vmem:[%s1 + $0x444] sm:$0xf]
  %v347 = vld [vmem:[%s1 + $0x448] sm:$0xf]
  %v348 = vld [vmem:[%s1 + $0x44c] sm:$0xf]
  %v349 = vld [vmem:[%s1 + $0x450] sm:$0xf]
  %v350 = vld [vmem:[%s1 + $0x454] sm:$0xf]
  %v351 = vld [vmem:[%s1 + $0x458] sm:$0xf]
  %v352 = vld [vmem:[%s1 + $0x45c] sm:$0xf]
  %v353 = vld [vmem:[%s1 + $0x460] sm:$0xf]
  %v354 = vld [vmem:[%s1 + $0x464] sm:$0xf]
  %v355 = vld [vmem:[%s1 + $0x468] sm:$0xf]
  %v356 = vld [vmem:[%s1 + $0x46c] sm:$0xf]
  %v357 = vld [vmem:[%s1 + $0x470] sm:$0xf]
  %v358 = vld [vmem:[%s1 + $0x474] sm:$0xf]
  %v359 = vld [vmem:[%s1 + $0x478] sm:$0xf]
  %v360 = vld [vmem:[%s1 + $0x47c] sm:$0xf]
  %v361 = vld [vmem:[%s1 + $0x480] sm:$0xf]
  %v362 = vld [vmem:[%s1 + $0x484] sm:$0xf]
  %v363 = vld [vmem:[%s1 + $0x488] sm:$0xf]
  %v364 = vld [vmem:[%s1 + $0x48c] sm:$0xf]
  %v365 = vld [vmem:[%s1 + $0x490] sm:$0xf]
  %v366 = vld [vmem:[%s1 + $0x494] sm:$0xf]
  %v367 = vld [vmem:[%s1 + $0x498] sm:$0xf]
  %v368 = vld [vmem:[%s1 + $0x49c] sm:$0xf]
  %v369 = vld [vmem:[%s1 + $0x4a0] sm:$0xf]
  %v370 = vld [vmem:[%s1 + $0x4a4] sm:$0xf]
  %v371 = vld [vmem:[%s1 + $0x4a8] sm:$0xf]
  %v372 = vld [vmem:[%s1 + $0x4ac] sm:$0xf]
  %v373 = vld [vmem:[%s1 + $0x4b0] sm:$0xf]
  %v374 = vld [vmem:[%s1 + $0x4b4] sm:$0xf]
  %v375 = vld [vmem:[%s1 + $0x4b8] sm:$0xf]
  %v376 = vld [vmem:[%s1 + $0x4bc] sm:$0xf]
  %v377 = vld [vmem:[%s1 + $0x4c0] sm:$0xf]
  %v378 = vld [vmem:[%s1 + $0x4c4] sm:$0xf]
  %v379 = vld [vmem:[%s1 + $0x4c8] sm:$0xf]
  %v380 = vld [vmem:[%s1 + $0x4cc] sm:$0xf]
  %v381 = vld [vmem:[%s1 + $0x4d0] sm:$0xf]
  %v382 = vld [vmem:[%s1 + $0x4d4] sm:$0xf]
  %v383 = vld [vmem:[%s1 + $0x4d8] sm:$0xf]
  %v384 = vld [vmem:[%s1 + $0x4dc] sm:$0xf]
  %v385 = vld [vmem:[%s1 + $0x4e0] sm:$0xf]
  %v386 = vld [vmem:[%s1 + $0x4e4] sm:$0xf]
  %v387 = vld [vmem:[%s1 + $0x4e8] sm:$0xf]
  %v388 = vld [vmem:[%s1 + $0x4ec] sm:$0xf]
  %v389 = vld [vmem:[%s1 + $0x4f0] sm:$0xf]
  %v390 = vld [vmem:[%s1 + $0x4f4] sm:$0xf]
  %v391 = vld [vmem:[%s1 + $0x4f8] sm:$0xf]
  %v392 = vld [vmem:[%s1 + $0x4fc] sm:$0xf]
  %v393 = vld [vmem:[%s1 + $0x500] sm:$0xf]
  %v394 = vld [vmem:[%s1 + $0x504] sm:$0xf]
  %v395 = vld [vmem:[%s1 + $0x508] sm:$0xf]
  %v396 = vld [vmem:[%s1 + $0x50c] sm:$0xf]
  %v397 = vld [vmem:[%s1 + $0x510] sm:$0xf]
  %v398 = vld [vmem:[%s1 + $0x514] sm:$0xf]
  %v399 = vld [vmem:[%s1 + $0x518] sm:$0xf]
  %v400 = vld [vmem:[%s1 + $0x51c] sm:$0xf]
  %v401 = vld [vmem:[%s1 + $0x520] sm:$0xf]
  %v402 = vld [vmem:[%s1 + $0x524] sm:$0xf]
  %v403 = vld [vmem:[%s1 + $0x528] sm:$0xf]
  %v404 = vld [vmem:[%s1 + $0x52c] sm:$0xf]
  %v405 = vld [vmem:[%s1 + $0x530] sm:$0xf]
  %v406 = vld [vmem:[%s1 + $0x534] sm:$0xf]
  %v407 = vld [vmem:[%s1 + $0x538] sm:$0xf]
  %v408 = vld [vmem:[%s1 + $0x53c] sm:$0xf]
  %v409 = vld [vmem:[%s1 + $0x540] sm:$0xf]
  %v410 = vld [vmem:[%s1 + $0x544] sm:$0xf]
  %v411 = vld [vmem:[%s1 + $0x548] sm:$0xf]
  %v412 = vld [vmem:[%s1 + $0x54c] sm:$0xf]
  %v413 = vld [vmem:[%s1 + $0x550] sm:$0xf]
  %v414 = vld [vmem:[%s1 + $0x554] sm:$0xf]
  %v415 = vld [vmem:[%s1 + $0x558] sm:$0xf]
  %v416 = vld [vmem:[%s1 + $0x55c] sm:$0xf]
  %v417 = vld [vmem:[%s1 + $0x560] sm:$0xf]
  %v418 = vld [vmem:[%s1 + $0x564] sm:$0xf]
  %v419 = vld [vmem:[%s1 + $0x568] sm:$0xf]
  %v420 = vld [vmem:[%s1 + $0x56c] sm:$0xf]
  %v421 = vld [vmem:[%s1 + $0x570] sm:$0xf]
  %v422 = vld [vmem:[%s1 + $0x574] sm:$0xf]
  %v423 = vld [vmem:[%s1 + $0x578] sm:$0xf]
  %v424 = vld [vmem:[%s1 + $0x57c] sm:$0xf]
  %v425 = vld [vmem:[%s1 + $0x580] sm:$0xf]
  %v426 = vld [vmem:[%s1 + $0x584] sm:$0xf]
  %v427 = vld [vmem:[%s1 + $0x588] sm:$0xf]
  %v428 = vld [vmem:[%s1 + $0x58c] sm:$0xf]
  %v429 = vld [vmem:[%s1 + $0x590] sm:$0xf]
  %v430 = vld [vmem:[%s1 + $0x594] sm:$0xf]
  %v431 = vld [vmem:[%s1 + $0x598] sm:$0xf]
  %v432 = vld [vmem:[%s1 + $0x59c] sm:$0xf]
  %v433 = vld [vmem:[%s1 + $0x5a0] sm:$0xf]
  %v434 = vld [vmem:[%s1 + $0x5a4] sm:$0xf]
  %v435 = vld [vmem:[%s1 + $0x5a8] sm:$0xf]
  %v436 = vld [vmem:[%s1 + $0x5ac] sm:$0xf]
  %v437 = vld [vmem:[%s1 + $0x5b0] sm:$0xf]
  %v438 = vld [vmem:[%s1 + $0x5b4] sm:$0xf]
  %v439 = vld [vmem:[%s1 + $0x5b8] sm:$0xf]
  %v440 = vld [vmem:[%s1 + $0x5bc] sm:$0xf]
  %v441 = vld [vmem:[%s1 + $0x5c0] sm:$0xf]
  %v442 = vld [vmem:[%s1 + $0x5c4] sm:$0xf]
  %v443 = vld [vmem:[%s1 + $0x5c8] sm:$0xf]
  %v444 = vld [vmem:[%s1 + $0x5cc] sm:$0xf]
  %v445 = vld [vmem:[%s1 + $0x5d0] sm:$0xf]
  %v446 = vld [vmem:[%s1 + $0x5d4] sm:$0xf]
  %v447 = vld [vmem:[%s1 + $0x5d8] sm:$0xf]
  %v448 = vld [vmem:[%s1 + $0x5dc] sm:$0xf]
  %v449 = vld [vmem:[%s1 + $0x5e0] sm:$0xf]
  %v450 = vld [vmem:[%s1 + $0x5e4] sm:$0xf]
  %v451 = vld [vmem:[%s1 + $0x5e8] sm:$0xf]
  %v452 = vld [vmem:[%s1 + $0x5ec] sm:$0xf]
  %v453 = vld [vmem:[%s1 + $0x5f0] sm:$0xf]
  %v454 = vld [vmem:[%s1 + $0x5f4] sm:$0xf]
  %v455 = vld [vmem:[%s1 + $0x5f8] sm:$0xf]
  %v456 = vld [vmem:[%s1 + $0x5fc] sm:$0xf]
  %v457 = vld [vmem:[%s1 + $0x600] sm:$0xf]
  %v458 = vld [vmem:[%s1 + $0x604] sm:$0xf]
  %v459 = vld [vmem:[%s1 + $0x608] sm:$0xf]
  %v460 = vld [vmem:[%s1 + $0x60c] sm:$0xf]
  %v461 = vld [vmem:[%s1 + $0x610] sm:$0xf]
  %v462 = vld [vmem:[%s1 + $0x614] sm:$0xf]
  %v463 = vld [vmem:[%s1 + $0x618] sm:$0xf]
  %v464 = vld [vmem:[%s1 + $0x61c] sm:$0xf]
  %v465 = vld [vmem:[%s1 + $0x620] sm:$0xf]
  %v466 = vld [vmem:[%s1 + $0x624] sm:$0xf]
  %v467 = vld [vmem:[%s1 + $0x628] sm:$0xf]
  %v468 = vld [vmem:[%s1 + $0x62c] sm:$0xf]
  %v469 = vld [vmem:[%s1 + $0x630] sm:$0xf]
  %v470 = vld [vmem:[%s1 + $0x634] sm:$0xf]
  %v471 = vld [vmem:[%s1 + $0x638] sm:$0xf]
  %v472 = vld [vmem:[%s1 + $0x63c] sm:$0xf]
  %v473 = vld [vmem:[%s2] sm:$0x1]
  %v475 = vlaneseq
  %v476 = vshrl.u32 %v475, 7
  %v477 = vsub.s32 0, %v476
  %v478 = vrot.slane %v473, %v477
  %v532 = vunpack.c.l.b16 %v21
  %v533 = vunpack.c.h.b16 %v21
  %v534 = vunpack.c.l.b16 %v22
  %v535 = vunpack.c.h.b16 %v22
  %v536 = vunpack.c.l.b16 %v23
  %v537 = vunpack.c.h.b16 %v23
  %v538 = vunpack.c.l.b16 %v24
  %v539 = vunpack.c.h.b16 %v24
  %v540 = vunpack.c.l.b16 %v25
  %v541 = vunpack.c.h.b16 %v25
  %v542 = vunpack.c.l.b16 %v26
  %v543 = vunpack.c.h.b16 %v26
  %v544 = vunpack.c.l.b16 %v27
  %v545 = vunpack.c.h.b16 %v27
  %v546 = vunpack.c.l.b16 %v28
  %v547 = vunpack.c.h.b16 %v28
  %v548 = vunpack.c.l.b16 %v29
  %v549 = vunpack.c.h.b16 %v29
  %v550 = vunpack.c.l.b16 %v30
  %v551 = vunpack.c.h.b16 %v30
  %v552 = vunpack.c.l.b16 %v31
  %v553 = vunpack.c.h.b16 %v31
  %v554 = vunpack.c.l.b16 %v32
  %v555 = vunpack.c.h.b16 %v32
  %v556 = vunpack.c.l.b16 %v33
  %v557 = vunpack.c.l.b16 %v34
  %v558 = vunpack.c.h.b16 %v34
  %v559 = vunpack.c.l.b16 %v35
  %v560 = vunpack.c.h.b16 %v35
  %v561 = vunpack.c.l.b16 %v36
  %v562 = vunpack.c.h.b16 %v36
  %v563 = vunpack.c.l.b16 %v37
  %v564 = vunpack.c.h.b16 %v37
  %v565 = vunpack.c.l.b16 %v38
  %v566 = vunpack.c.h.b16 %v38
  %v567 = vunpack.c.l.b16 %v39
  %v568 = vunpack.c.h.b16 %v39
  %v569 = vunpack.c.l.b16 %v40
  %v570 = vunpack.c.h.b16 %v40
  %v571 = vunpack.c.l.b16 %v41
  %v572 = vunpack.c.h.b16 %v41
  %v573 = vunpack.c.l.b16 %v42
  %v574 = vunpack.c.h.b16 %v42
  %v575 = vunpack.c.l.b16 %v43
  %v576 = vunpack.c.h.b16 %v43
  %v577 = vunpack.c.l.b16 %v44
  %v578 = vunpack.c.h.b16 %v44
  %v579 = vunpack.c.l.b16 %v45
  %v580 = vunpack.c.h.b16 %v45
  %v581 = vunpack.c.l.b16 %v46
  %v582 = vunpack.c.l.b16 %v47
  %v583 = vunpack.c.h.b16 %v47
  %v584 = vunpack.c.l.b16 %v48
  %v585 = vunpack.c.h.b16 %v48
  %v586 = vunpack.c.l.b16 %v49
  %v587 = vunpack.c.h.b16 %v49
  %v588 = vunpack.c.l.b16 %v50
  %v589 = vunpack.c.h.b16 %v50
  %v590 = vunpack.c.l.b16 %v51
  %v591 = vunpack.c.h.b16 %v51
  %v592 = vunpack.c.l.b16 %v52
  %v593 = vunpack.c.h.b16 %v52
  %v594 = vunpack.c.l.b16 %v53
  %v595 = vunpack.c.h.b16 %v53
  %v596 = vunpack.c.l.b16 %v54
  %v597 = vunpack.c.h.b16 %v54
  %v598 = vunpack.c.l.b16 %v55
  %v599 = vunpack.c.h.b16 %v55
  %v600 = vunpack.c.l.b16 %v56
  %v601 = vunpack.c.h.b16 %v56
  %v602 = vunpack.c.l.b16 %v57
  %v603 = vunpack.c.h.b16 %v57
  %v604 = vunpack.c.l.b16 %v58
  %v605 = vunpack.c.h.b16 %v58
  %v606 = vunpack.c.l.b16 %v59
  %v607 = vunpack.c.l.b16 %v60
  %v608 = vunpack.c.h.b16 %v60
  %v609 = vunpack.c.l.b16 %v61
  %v610 = vunpack.c.h.b16 %v61
  %v611 = vunpack.c.l.b16 %v62
  %v612 = vunpack.c.h.b16 %v62
  %v613 = vunpack.c.l.b16 %v63
  %v614 = vunpack.c.h.b16 %v63
  %v615 = vunpack.c.l.b16 %v64
  %v616 = vunpack.c.h.b16 %v64
  %v617 = vunpack.c.l.b16 %v65
  %v618 = vunpack.c.h.b16 %v65
  %v619 = vunpack.c.l.b16 %v66
  %v620 = vunpack.c.h.b16 %v66
  %v621 = vunpack.c.l.b16 %v67
  %v622 = vunpack.c.h.b16 %v67
  %v623 = vunpack.c.l.b16 %v68
  %v624 = vunpack.c.h.b16 %v68
  %v625 = vunpack.c.l.b16 %v69
  %v626 = vunpack.c.h.b16 %v69
  %v627 = vunpack.c.l.b16 %v70
  %v628 = vunpack.c.h.b16 %v70
  %v629 = vunpack.c.l.b16 %v71
  %v630 = vunpack.c.h.b16 %v71
  %v631 = vunpack.c.l.b16 %v72
  %v632 = vpack.c.b16 %v557, %v532
  %v633 = vpack.c.b16 %v558, %v533
  %v634 = vpack.c.b16 %v559, %v534
  %v635 = vpack.c.b16 %v560, %v535
  %v636 = vpack.c.b16 %v561, %v536
  %v637 = vpack.c.b16 %v562, %v537
  %v638 = vpack.c.b16 %v563, %v538
  %v639 = vpack.c.b16 %v564, %v539
  %v640 = vpack.c.b16 %v565, %v540
  %v641 = vpack.c.b16 %v566, %v541
  %v642 = vpack.c.b16 %v567, %v542
  %v643 = vpack.c.b16 %v568, %v543
  %v644 = vpack.c.b16 %v569, %v544
  %v645 = vpack.c.b16 %v570, %v545
  %v646 = vpack.c.b16 %v571, %v546
  %v647 = vpack.c.b16 %v572, %v547
  %v648 = vpack.c.b16 %v573, %v548
  %v649 = vpack.c.b16 %v574, %v549
  %v650 = vpack.c.b16 %v575, %v550
  %v651 = vpack.c.b16 %v576, %v551
  %v652 = vpack.c.b16 %v577, %v552
  %v653 = vpack.c.b16 %v578, %v553
  %v654 = vpack.c.b16 %v579, %v554
  %v655 = vpack.c.b16 %v580, %v555
  %v656 = vpack.c.b16 %v581, %v556
  %v657 = vpack.c.b16 %v607, %v582
  %v658 = vpack.c.b16 %v608, %v583
  %v659 = vpack.c.b16 %v609, %v584
  %v660 = vpack.c.b16 %v610, %v585
  %v661 = vpack.c.b16 %v611, %v586
  %v662 = vpack.c.b16 %v612, %v587
  %v663 = vpack.c.b16 %v613, %v588
  %v664 = vpack.c.b16 %v614, %v589
  %v665 = vpack.c.b16 %v615, %v590
  %v666 = vpack.c.b16 %v616, %v591
  %v667 = vpack.c.b16 %v617, %v592
  %v668 = vpack.c.b16 %v618, %v593
  %v669 = vpack.c.b16 %v619, %v594
  %v670 = vpack.c.b16 %v620, %v595
  %v671 = vpack.c.b16 %v621, %v596
  %v672 = vpack.c.b16 %v622, %v597
  %v673 = vpack.c.b16 %v623, %v598
  %v674 = vpack.c.b16 %v624, %v599
  %v675 = vpack.c.b16 %v625, %v600
  %v676 = vpack.c.b16 %v626, %v601
  %v677 = vpack.c.b16 %v627, %v602
  %v678 = vpack.c.b16 %v628, %v603
  %v679 = vpack.c.b16 %v629, %v604
  %v680 = vpack.c.b16 %v630, %v605
  %v681 = vpack.c.b16 %v631, %v606
  %v1132 = vunpack.c.l.b16 %v73
  %v1133 = vunpack.c.l.b16 %v74
  %v1134 = vunpack.c.l.b16 %v75
  %v1135 = vunpack.c.l.b16 %v76
  %v1136 = vunpack.c.l.b16 %v77
  %v1137 = vunpack.c.l.b16 %v78
  %v1138 = vunpack.c.l.b16 %v79
  %v1139 = vunpack.c.l.b16 %v80
  %v1140 = vunpack.c.l.b16 %v81
  %v1141 = vunpack.c.l.b16 %v82
  %v1142 = vunpack.c.l.b16 %v83
  %v1143 = vunpack.c.l.b16 %v84
  %v1144 = vunpack.c.l.b16 %v85
  %v1145 = vunpack.c.l.b16 %v86
  %v1146 = vunpack.c.l.b16 %v87
  %v1147 = vunpack.c.l.b16 %v88
  %v1148 = vunpack.c.l.b16 %v89
  %v1149 = vunpack.c.l.b16 %v90
  %v1150 = vunpack.c.l.b16 %v91
  %v1151 = vunpack.c.l.b16 %v92
  %v1152 = vunpack.c.l.b16 %v93
  %v1153 = vunpack.c.l.b16 %v94
  %v1154 = vunpack.c.l.b16 %v95
  %v1155 = vunpack.c.l.b16 %v96
  %v1156 = vunpack.c.l.b16 %v97
  %v1157 = vunpack.c.l.b16 %v98
  %v1158 = vunpack.c.l.b16 %v99
  %v1159 = vunpack.c.l.b16 %v100
  %v1160 = vunpack.c.l.b16 %v101
  %v1161 = vunpack.c.l.b16 %v102
  %v1162 = vunpack.c.l.b16 %v103
  %v1163 = vunpack.c.l.b16 %v104
  %v1164 = vunpack.c.l.b16 %v105
  %v1165 = vunpack.c.l.b16 %v106
  %v1166 = vunpack.c.l.b16 %v107
  %v1167 = vunpack.c.l.b16 %v108
  %v1168 = vunpack.c.l.b16 %v109
  %v1169 = vunpack.c.l.b16 %v110
  %v1170 = vunpack.c.l.b16 %v111
  %v1171 = vunpack.c.l.b16 %v112
  %v1172 = vunpack.c.l.b16 %v113
  %v1173 = vunpack.c.l.b16 %v114
  %v1174 = vunpack.c.l.b16 %v115
  %v1175 = vunpack.c.l.b16 %v116
  %v1176 = vunpack.c.l.b16 %v117
  %v1177 = vunpack.c.l.b16 %v118
  %v1178 = vunpack.c.l.b16 %v119
  %v1179 = vunpack.c.l.b16 %v120
  %v1180 = vunpack.c.l.b16 %v121
  %v1181 = vunpack.c.l.b16 %v122
  %v1182 = vunpack.c.l.b16 %v123
  %v1183 = vunpack.c.l.b16 %v124
  %v1184 = vunpack.c.l.b16 %v125
  %v1185 = vunpack.c.l.b16 %v126
  %v1186 = vunpack.c.l.b16 %v127
  %v1187 = vunpack.c.l.b16 %v128
  %v1188 = vunpack.c.l.b16 %v129
  %v1189 = vunpack.c.l.b16 %v130
  %v1190 = vunpack.c.l.b16 %v131
  %v1191 = vunpack.c.l.b16 %v132
  %v1192 = vunpack.c.l.b16 %v133
  %v1193 = vunpack.c.l.b16 %v134
  %v1194 = vunpack.c.l.b16 %v135
  %v1195 = vunpack.c.l.b16 %v136
  %v1196 = vunpack.c.l.b16 %v137
  %v1197 = vunpack.c.l.b16 %v138
  %v1198 = vunpack.c.l.b16 %v139
  %v1199 = vunpack.c.l.b16 %v140
  %v1200 = vunpack.c.l.b16 %v141
  %v1201 = vunpack.c.l.b16 %v142
  %v1202 = vunpack.c.l.b16 %v143
  %v1203 = vunpack.c.l.b16 %v144
  %v1204 = vunpack.c.l.b16 %v145
  %v1205 = vunpack.c.l.b16 %v146
  %v1206 = vunpack.c.l.b16 %v147
  %v1207 = vunpack.c.l.b16 %v148
  %v1208 = vunpack.c.l.b16 %v149
  %v1209 = vunpack.c.l.b16 %v150
  %v1210 = vunpack.c.l.b16 %v151
  %v1211 = vunpack.c.l.b16 %v152
  %v1212 = vunpack.c.l.b16 %v153
  %v1213 = vunpack.c.l.b16 %v154
  %v1214 = vunpack.c.l.b16 %v155
  %v1215 = vunpack.c.l.b16 %v156
  %v1216 = vunpack.c.l.b16 %v157
  %v1217 = vunpack.c.l.b16 %v158
  %v1218 = vunpack.c.l.b16 %v159
  %v1219 = vunpack.c.l.b16 %v160
  %v1220 = vunpack.c.l.b16 %v161
  %v1221 = vunpack.c.l.b16 %v162
  %v1222 = vunpack.c.l.b16 %v163
  %v1223 = vunpack.c.l.b16 %v164
  %v1224 = vunpack.c.l.b16 %v165
  %v1225 = vunpack.c.l.b16 %v166
  %v1226 = vunpack.c.l.b16 %v167
  %v1227 = vunpack.c.l.b16 %v168
  %v1228 = vunpack.c.l.b16 %v169
  %v1229 = vunpack.c.l.b16 %v170
  %v1230 = vunpack.c.l.b16 %v171
  %v1231 = vunpack.c.l.b16 %v172
  %v1232 = vunpack.c.l.b16 %v173
  %v1233 = vunpack.c.l.b16 %v174
  %v1234 = vunpack.c.l.b16 %v175
  %v1235 = vunpack.c.l.b16 %v176
  %v1236 = vunpack.c.l.b16 %v177
  %v1237 = vunpack.c.l.b16 %v178
  %v1238 = vunpack.c.l.b16 %v179
  %v1239 = vunpack.c.l.b16 %v180
  %v1240 = vunpack.c.l.b16 %v181
  %v1241 = vunpack.c.l.b16 %v182
  %v1242 = vunpack.c.l.b16 %v183
  %v1243 = vunpack.c.l.b16 %v184
  %v1244 = vunpack.c.l.b16 %v185
  %v1245 = vunpack.c.l.b16 %v186
  %v1246 = vunpack.c.l.b16 %v187
  %v1247 = vunpack.c.l.b16 %v188
  %v1248 = vunpack.c.l.b16 %v189
  %v1249 = vunpack.c.l.b16 %v190
  %v1250 = vunpack.c.l.b16 %v191
  %v1251 = vunpack.c.l.b16 %v192
  %v1252 = vunpack.c.l.b16 %v193
  %v1253 = vunpack.c.l.b16 %v194
  %v1254 = vunpack.c.l.b16 %v195
  %v1255 = vunpack.c.l.b16 %v196
  %v1256 = vunpack.c.l.b16 %v197
  %v1257 = vunpack.c.l.b16 %v198
  %v1258 = vunpack.c.l.b16 %v199
  %v1259 = vunpack.c.l.b16 %v200
  %v1260 = vunpack.c.l.b16 %v201
  %v1261 = vunpack.c.l.b16 %v202
  %v1262 = vunpack.c.l.b16 %v203
  %v1263 = vunpack.c.l.b16 %v204
  %v1264 = vunpack.c.l.b16 %v205
  %v1265 = vunpack.c.l.b16 %v206
  %v1266 = vunpack.c.l.b16 %v207
  %v1267 = vunpack.c.l.b16 %v208
  %v1268 = vunpack.c.l.b16 %v209
  %v1269 = vunpack.c.l.b16 %v210
  %v1270 = vunpack.c.l.b16 %v211
  %v1271 = vunpack.c.l.b16 %v212
  %v1272 = vunpack.c.l.b16 %v213
  %v1273 = vunpack.c.l.b16 %v214
  %v1274 = vunpack.c.l.b16 %v215
  %v1275 = vunpack.c.l.b16 %v216
  %v1276 = vunpack.c.l.b16 %v217
  %v1277 = vunpack.c.l.b16 %v218
  %v1278 = vunpack.c.l.b16 %v219
  %v1279 = vunpack.c.l.b16 %v220
  %v1280 = vunpack.c.l.b16 %v221
  %v1281 = vunpack.c.l.b16 %v222
  %v1282 = vunpack.c.l.b16 %v223
  %v1283 = vunpack.c.l.b16 %v224
  %v1284 = vunpack.c.l.b16 %v225
  %v1285 = vunpack.c.l.b16 %v226
  %v1286 = vunpack.c.l.b16 %v227
  %v1287 = vunpack.c.l.b16 %v228
  %v1288 = vunpack.c.l.b16 %v229
  %v1289 = vunpack.c.l.b16 %v230
  %v1290 = vunpack.c.l.b16 %v231
  %v1291 = vunpack.c.l.b16 %v232
  %v1292 = vunpack.c.l.b16 %v233
  %v1293 = vunpack.c.l.b16 %v234
  %v1294 = vunpack.c.l.b16 %v235
  %v1295 = vunpack.c.l.b16 %v236
  %v1296 = vunpack.c.l.b16 %v237
  %v1297 = vunpack.c.l.b16 %v238
  %v1298 = vunpack.c.l.b16 %v239
  %v1299 = vunpack.c.l.b16 %v240
  %v1300 = vunpack.c.l.b16 %v241
  %v1301 = vunpack.c.l.b16 %v242
  %v1302 = vunpack.c.l.b16 %v243
  %v1303 = vunpack.c.l.b16 %v244
  %v1304 = vunpack.c.l.b16 %v245
  %v1305 = vunpack.c.l.b16 %v246
  %v1306 = vunpack.c.l.b16 %v247
  %v1307 = vunpack.c.l.b16 %v248
  %v1308 = vunpack.c.l.b16 %v249
  %v1309 = vunpack.c.l.b16 %v250
  %v1310 = vunpack.c.l.b16 %v251
  %v1311 = vunpack.c.l.b16 %v252
  %v1312 = vunpack.c.l.b16 %v253
  %v1313 = vunpack.c.l.b16 %v254
  %v1314 = vunpack.c.l.b16 %v255
  %v1315 = vunpack.c.l.b16 %v256
  %v1316 = vunpack.c.l.b16 %v257
  %v1317 = vunpack.c.l.b16 %v258
  %v1318 = vunpack.c.l.b16 %v259
  %v1319 = vunpack.c.l.b16 %v260
  %v1320 = vunpack.c.l.b16 %v261
  %v1321 = vunpack.c.l.b16 %v262
  %v1322 = vunpack.c.l.b16 %v263
  %v1323 = vunpack.c.l.b16 %v264
  %v1324 = vunpack.c.l.b16 %v265
  %v1325 = vunpack.c.l.b16 %v266
  %v1326 = vunpack.c.l.b16 %v267
  %v1327 = vunpack.c.l.b16 %v268
  %v1328 = vunpack.c.l.b16 %v269
  %v1329 = vunpack.c.l.b16 %v270
  %v1330 = vunpack.c.l.b16 %v271
  %v1331 = vunpack.c.l.b16 %v272
  %v1332 = vunpack.c.l.b16 %v273
  %v1333 = vunpack.c.l.b16 %v274
  %v1334 = vunpack.c.l.b16 %v275
  %v1335 = vunpack.c.l.b16 %v276
  %v1336 = vunpack.c.l.b16 %v277
  %v1337 = vunpack.c.l.b16 %v278
  %v1338 = vunpack.c.l.b16 %v279
  %v1339 = vunpack.c.l.b16 %v280
  %v1340 = vunpack.c.l.b16 %v281
  %v1341 = vunpack.c.l.b16 %v282
  %v1342 = vunpack.c.l.b16 %v283
  %v1343 = vunpack.c.l.b16 %v284
  %v1344 = vunpack.c.l.b16 %v285
  %v1345 = vunpack.c.l.b16 %v286
  %v1346 = vunpack.c.l.b16 %v287
  %v1347 = vunpack.c.l.b16 %v288
  %v1348 = vunpack.c.l.b16 %v289
  %v1349 = vunpack.c.l.b16 %v290
  %v1350 = vunpack.c.l.b16 %v291
  %v1351 = vunpack.c.l.b16 %v292
  %v1352 = vunpack.c.l.b16 %v293
  %v1353 = vunpack.c.l.b16 %v294
  %v1354 = vunpack.c.l.b16 %v295
  %v1355 = vunpack.c.l.b16 %v296
  %v1356 = vunpack.c.l.b16 %v297
  %v1357 = vunpack.c.l.b16 %v298
  %v1358 = vunpack.c.l.b16 %v299
  %v1359 = vunpack.c.l.b16 %v300
  %v1360 = vunpack.c.l.b16 %v301
  %v1361 = vunpack.c.l.b16 %v302
  %v1362 = vunpack.c.l.b16 %v303
  %v1363 = vunpack.c.l.b16 %v304
  %v1364 = vunpack.c.l.b16 %v305
  %v1365 = vunpack.c.l.b16 %v306
  %v1366 = vunpack.c.l.b16 %v307
  %v1367 = vunpack.c.l.b16 %v308
  %v1368 = vunpack.c.l.b16 %v309
  %v1369 = vunpack.c.l.b16 %v310
  %v1370 = vunpack.c.l.b16 %v311
  %v1371 = vunpack.c.l.b16 %v312
  %v1372 = vunpack.c.l.b16 %v313
  %v1373 = vunpack.c.l.b16 %v314
  %v1374 = vunpack.c.l.b16 %v315
  %v1375 = vunpack.c.l.b16 %v316
  %v1376 = vunpack.c.l.b16 %v317
  %v1377 = vunpack.c.l.b16 %v318
  %v1378 = vunpack.c.l.b16 %v319
  %v1379 = vunpack.c.l.b16 %v320
  %v1380 = vunpack.c.l.b16 %v321
  %v1381 = vunpack.c.l.b16 %v322
  %v1382 = vunpack.c.l.b16 %v323
  %v1383 = vunpack.c.l.b16 %v324
  %v1384 = vunpack.c.l.b16 %v325
  %v1385 = vunpack.c.l.b16 %v326
  %v1386 = vunpack.c.l.b16 %v327
  %v1387 = vunpack.c.l.b16 %v328
  %v1388 = vunpack.c.l.b16 %v329
  %v1389 = vunpack.c.l.b16 %v330
  %v1390 = vunpack.c.l.b16 %v331
  %v1391 = vunpack.c.l.b16 %v332
  %v1392 = vunpack.c.l.b16 %v333
  %v1393 = vunpack.c.l.b16 %v334
  %v1394 = vunpack.c.l.b16 %v335
  %v1395 = vunpack.c.l.b16 %v336
  %v1396 = vunpack.c.l.b16 %v337
  %v1397 = vunpack.c.l.b16 %v338
  %v1398 = vunpack.c.l.b16 %v339
  %v1399 = vunpack.c.l.b16 %v340
  %v1400 = vunpack.c.l.b16 %v341
  %v1401 = vunpack.c.l.b16 %v342
  %v1402 = vunpack.c.l.b16 %v343
  %v1403 = vunpack.c.l.b16 %v344
  %v1404 = vunpack.c.l.b16 %v345
  %v1405 = vunpack.c.l.b16 %v346
  %v1406 = vunpack.c.l.b16 %v347
  %v1407 = vunpack.c.l.b16 %v348
  %v1408 = vunpack.c.l.b16 %v349
  %v1409 = vunpack.c.l.b16 %v350
  %v1410 = vunpack.c.l.b16 %v351
  %v1411 = vunpack.c.l.b16 %v352
  %v1412 = vunpack.c.l.b16 %v353
  %v1413 = vunpack.c.l.b16 %v354
  %v1414 = vunpack.c.l.b16 %v355
  %v1415 = vunpack.c.l.b16 %v356
  %v1416 = vunpack.c.l.b16 %v357
  %v1417 = vunpack.c.l.b16 %v358
  %v1418 = vunpack.c.l.b16 %v359
  %v1419 = vunpack.c.l.b16 %v360
  %v1420 = vunpack.c.l.b16 %v361
  %v1421 = vunpack.c.l.b16 %v362
  %v1422 = vunpack.c.l.b16 %v363
  %v1423 = vunpack.c.l.b16 %v364
  %v1424 = vunpack.c.l.b16 %v365
  %v1425 = vunpack.c.l.b16 %v366
  %v1426 = vunpack.c.l.b16 %v367
  %v1427 = vunpack.c.l.b16 %v368
  %v1428 = vunpack.c.l.b16 %v369
  %v1429 = vunpack.c.l.b16 %v370
  %v1430 = vunpack.c.l.b16 %v371
  %v1431 = vunpack.c.l.b16 %v372
  %v1432 = vunpack.c.l.b16 %v373
  %v1433 = vunpack.c.l.b16 %v374
  %v1434 = vunpack.c.l.b16 %v375
  %v1435 = vunpack.c.l.b16 %v376
  %v1436 = vunpack.c.l.b16 %v377
  %v1437 = vunpack.c.l.b16 %v378
  %v1438 = vunpack.c.l.b16 %v379
  %v1439 = vunpack.c.l.b16 %v380
  %v1440 = vunpack.c.l.b16 %v381
  %v1441 = vunpack.c.l.b16 %v382
  %v1442 = vunpack.c.l.b16 %v383
  %v1443 = vunpack.c.l.b16 %v384
  %v1444 = vunpack.c.l.b16 %v385
  %v1445 = vunpack.c.l.b16 %v386
  %v1446 = vunpack.c.l.b16 %v387
  %v1447 = vunpack.c.l.b16 %v388
  %v1448 = vunpack.c.l.b16 %v389
  %v1449 = vunpack.c.l.b16 %v390
  %v1450 = vunpack.c.l.b16 %v391
  %v1451 = vunpack.c.l.b16 %v392
  %v1452 = vunpack.c.l.b16 %v393
  %v1453 = vunpack.c.l.b16 %v394
  %v1454 = vunpack.c.l.b16 %v395
  %v1455 = vunpack.c.l.b16 %v396
  %v1456 = vunpack.c.l.b16 %v397
  %v1457 = vunpack.c.l.b16 %v398
  %v1458 = vunpack.c.l.b16 %v399
  %v1459 = vunpack.c.l.b16 %v400
  %v1460 = vunpack.c.l.b16 %v401
  %v1461 = vunpack.c.l.b16 %v402
  %v1462 = vunpack.c.l.b16 %v403
  %v1463 = vunpack.c.l.b16 %v404
  %v1464 = vunpack.c.l.b16 %v405
  %v1465 = vunpack.c.l.b16 %v406
  %v1466 = vunpack.c.l.b16 %v407
  %v1467 = vunpack.c.l.b16 %v408
  %v1468 = vunpack.c.l.b16 %v409
  %v1469 = vunpack.c.l.b16 %v410
  %v1470 = vunpack.c.l.b16 %v411
  %v1471 = vunpack.c.l.b16 %v412
  %v1472 = vunpack.c.l.b16 %v413
  %v1473 = vunpack.c.l.b16 %v414
  %v1474 = vunpack.c.l.b16 %v415
  %v1475 = vunpack.c.l.b16 %v416
  %v1476 = vunpack.c.l.b16 %v417
  %v1477 = vunpack.c.l.b16 %v418
  %v1478 = vunpack.c.l.b16 %v419
  %v1479 = vunpack.c.l.b16 %v420
  %v1480 = vunpack.c.l.b16 %v421
  %v1481 = vunpack.c.l.b16 %v422
  %v1482 = vunpack.c.l.b16 %v423
  %v1483 = vunpack.c.l.b16 %v424
  %v1484 = vunpack.c.l.b16 %v425
  %v1485 = vunpack.c.l.b16 %v426
  %v1486 = vunpack.c.l.b16 %v427
  %v1487 = vunpack.c.l.b16 %v428
  %v1488 = vunpack.c.l.b16 %v429
  %v1489 = vunpack.c.l.b16 %v430
  %v1490 = vunpack.c.l.b16 %v431
  %v1491 = vunpack.c.l.b16 %v432
  %v1492 = vunpack.c.l.b16 %v433
  %v1493 = vunpack.c.l.b16 %v434
  %v1494 = vunpack.c.l.b16 %v435
  %v1495 = vunpack.c.l.b16 %v436
  %v1496 = vunpack.c.l.b16 %v437
  %v1497 = vunpack.c.l.b16 %v438
  %v1498 = vunpack.c.l.b16 %v439
  %v1499 = vunpack.c.l.b16 %v440
  %v1500 = vunpack.c.l.b16 %v441
  %v1501 = vunpack.c.l.b16 %v442
  %v1502 = vunpack.c.l.b16 %v443
  %v1503 = vunpack.c.l.b16 %v444
  %v1504 = vunpack.c.l.b16 %v445
  %v1505 = vunpack.c.l.b16 %v446
  %v1506 = vunpack.c.l.b16 %v447
  %v1507 = vunpack.c.l.b16 %v448
  %v1508 = vunpack.c.l.b16 %v449
  %v1509 = vunpack.c.l.b16 %v450
  %v1510 = vunpack.c.l.b16 %v451
  %v1511 = vunpack.c.l.b16 %v452
  %v1512 = vunpack.c.l.b16 %v453
  %v1513 = vunpack.c.l.b16 %v454
  %v1514 = vunpack.c.l.b16 %v455
  %v1515 = vunpack.c.l.b16 %v456
  %v1516 = vunpack.c.l.b16 %v457
  %v1517 = vunpack.c.l.b16 %v458
  %v1518 = vunpack.c.l.b16 %v459
  %v1519 = vunpack.c.l.b16 %v460
  %v1520 = vunpack.c.l.b16 %v461
  %v1521 = vunpack.c.l.b16 %v462
  %v1522 = vunpack.c.l.b16 %v463
  %v1523 = vunpack.c.l.b16 %v464
  %v1524 = vunpack.c.l.b16 %v465
  %v1525 = vunpack.c.l.b16 %v466
  %v1526 = vunpack.c.l.b16 %v467
  %v1527 = vunpack.c.l.b16 %v468
  %v1528 = vunpack.c.l.b16 %v469
  %v1529 = vunpack.c.l.b16 %v470
  %v1530 = vunpack.c.l.b16 %v471
  %v1531 = vunpack.c.l.b16 %v472
  %v1532 = vpack.c.b16 %v1133, %v1132
  %v1533 = vpack.c.b16 %v1135, %v1134
  %v1534 = vpack.c.b16 %v1137, %v1136
  %v1535 = vpack.c.b16 %v1139, %v1138
  %v1536 = vpack.c.b16 %v1141, %v1140
  %v1537 = vpack.c.b16 %v1143, %v1142
  %v1538 = vpack.c.b16 %v1145, %v1144
  %v1539 = vpack.c.b16 %v1147, %v1146
  %v1540 = vpack.c.b16 %v1149, %v1148
  %v1541 = vpack.c.b16 %v1151, %v1150
  %v1542 = vpack.c.b16 %v1153, %v1152
  %v1543 = vpack.c.b16 %v1155, %v1154
  %v1544 = vpack.c.b16 %v1157, %v1156
  %v1545 = vpack.c.b16 %v1159, %v1158
  %v1546 = vpack.c.b16 %v1161, %v1160
  %v1547 = vpack.c.b16 %v1163, %v1162
  %v1548 = vpack.c.b16 %v1165, %v1164
  %v1549 = vpack.c.b16 %v1167, %v1166
  %v1550 = vpack.c.b16 %v1169, %v1168
  %v1551 = vpack.c.b16 %v1171, %v1170
  %v1552 = vpack.c.b16 %v1173, %v1172
  %v1553 = vpack.c.b16 %v1175, %v1174
  %v1554 = vpack.c.b16 %v1177, %v1176
  %v1555 = vpack.c.b16 %v1179, %v1178
  %v1556 = vpack.c.b16 %v1181, %v1180
  %v1557 = vpack.c.b16 %v1183, %v1182
  %v1558 = vpack.c.b16 %v1185, %v1184
  %v1559 = vpack.c.b16 %v1187, %v1186
  %v1560 = vpack.c.b16 %v1189, %v1188
  %v1561 = vpack.c.b16 %v1191, %v1190
  %v1562 = vpack.c.b16 %v1193, %v1192
  %v1563 = vpack.c.b16 %v1195, %v1194
  %v1564 = vpack.c.b16 %v1197, %v1196
  %v1565 = vpack.c.b16 %v1199, %v1198
  %v1566 = vpack.c.b16 %v1201, %v1200
  %v1567 = vpack.c.b16 %v1203, %v1202
  %v1568 = vpack.c.b16 %v1205, %v1204
  %v1569 = vpack.c.b16 %v1207, %v1206
  %v1570 = vpack.c.b16 %v1209, %v1208
  %v1571 = vpack.c.b16 %v1211, %v1210
  %v1572 = vpack.c.b16 %v1213, %v1212
  %v1573 = vpack.c.b16 %v1215, %v1214
  %v1574 = vpack.c.b16 %v1217, %v1216
  %v1575 = vpack.c.b16 %v1219, %v1218
  %v1576 = vpack.c.b16 %v1221, %v1220
  %v1577 = vpack.c.b16 %v1223, %v1222
  %v1578 = vpack.c.b16 %v1225, %v1224
  %v1579 = vpack.c.b16 %v1227, %v1226
  %v1580 = vpack.c.b16 %v1229, %v1228
  %v1581 = vpack.c.b16 %v1231, %v1230
  %v1582 = vpack.c.b16 %v1233, %v1232
  %v1583 = vpack.c.b16 %v1235, %v1234
  %v1584 = vpack.c.b16 %v1237, %v1236
  %v1585 = vpack.c.b16 %v1239, %v1238
  %v1586 = vpack.c.b16 %v1241, %v1240
  %v1587 = vpack.c.b16 %v1243, %v1242
  %v1588 = vpack.c.b16 %v1245, %v1244
  %v1589 = vpack.c.b16 %v1247, %v1246
  %v1590 = vpack.c.b16 %v1249, %v1248
  %v1591 = vpack.c.b16 %v1251, %v1250
  %v1592 = vpack.c.b16 %v1253, %v1252
  %v1593 = vpack.c.b16 %v1255, %v1254
  %v1594 = vpack.c.b16 %v1257, %v1256
  %v1595 = vpack.c.b16 %v1259, %v1258
  %v1596 = vpack.c.b16 %v1261, %v1260
  %v1597 = vpack.c.b16 %v1263, %v1262
  %v1598 = vpack.c.b16 %v1265, %v1264
  %v1599 = vpack.c.b16 %v1267, %v1266
  %v1600 = vpack.c.b16 %v1269, %v1268
  %v1601 = vpack.c.b16 %v1271, %v1270
  %v1602 = vpack.c.b16 %v1273, %v1272
  %v1603 = vpack.c.b16 %v1275, %v1274
  %v1604 = vpack.c.b16 %v1277, %v1276
  %v1605 = vpack.c.b16 %v1279, %v1278
  %v1606 = vpack.c.b16 %v1281, %v1280
  %v1607 = vpack.c.b16 %v1283, %v1282
  %v1608 = vpack.c.b16 %v1285, %v1284
  %v1609 = vpack.c.b16 %v1287, %v1286
  %v1610 = vpack.c.b16 %v1289, %v1288
  %v1611 = vpack.c.b16 %v1291, %v1290
  %v1612 = vpack.c.b16 %v1293, %v1292
  %v1613 = vpack.c.b16 %v1295, %v1294
  %v1614 = vpack.c.b16 %v1297, %v1296
  %v1615 = vpack.c.b16 %v1299, %v1298
  %v1616 = vpack.c.b16 %v1301, %v1300
  %v1617 = vpack.c.b16 %v1303, %v1302
  %v1618 = vpack.c.b16 %v1305, %v1304
  %v1619 = vpack.c.b16 %v1307, %v1306
  %v1620 = vpack.c.b16 %v1309, %v1308
  %v1621 = vpack.c.b16 %v1311, %v1310
  %v1622 = vpack.c.b16 %v1313, %v1312
  %v1623 = vpack.c.b16 %v1315, %v1314
  %v1624 = vpack.c.b16 %v1317, %v1316
  %v1625 = vpack.c.b16 %v1319, %v1318
  %v1626 = vpack.c.b16 %v1321, %v1320
  %v1627 = vpack.c.b16 %v1323, %v1322
  %v1628 = vpack.c.b16 %v1325, %v1324
  %v1629 = vpack.c.b16 %v1327, %v1326
  %v1630 = vpack.c.b16 %v1329, %v1328
  %v1631 = vpack.c.b16 %v1331, %v1330
  %v1632 = vpack.c.b16 %v1333, %v1332
  %v1633 = vpack.c.b16 %v1335, %v1334
  %v1634 = vpack.c.b16 %v1337, %v1336
  %v1635 = vpack.c.b16 %v1339, %v1338
  %v1636 = vpack.c.b16 %v1341, %v1340
  %v1637 = vpack.c.b16 %v1343, %v1342
  %v1638 = vpack.c.b16 %v1345, %v1344
  %v1639 = vpack.c.b16 %v1347, %v1346
  %v1640 = vpack.c.b16 %v1349, %v1348
  %v1641 = vpack.c.b16 %v1351, %v1350
  %v1642 = vpack.c.b16 %v1353, %v1352
  %v1643 = vpack.c.b16 %v1355, %v1354
  %v1644 = vpack.c.b16 %v1357, %v1356
  %v1645 = vpack.c.b16 %v1359, %v1358
  %v1646 = vpack.c.b16 %v1361, %v1360
  %v1647 = vpack.c.b16 %v1363, %v1362
  %v1648 = vpack.c.b16 %v1365, %v1364
  %v1649 = vpack.c.b16 %v1367, %v1366
  %v1650 = vpack.c.b16 %v1369, %v1368
  %v1651 = vpack.c.b16 %v1371, %v1370
  %v1652 = vpack.c.b16 %v1373, %v1372
  %v1653 = vpack.c.b16 %v1375, %v1374
  %v1654 = vpack.c.b16 %v1377, %v1376
  %v1655 = vpack.c.b16 %v1379, %v1378
  %v1656 = vpack.c.b16 %v1381, %v1380
  %v1657 = vpack.c.b16 %v1383, %v1382
  %v1658 = vpack.c.b16 %v1385, %v1384
  %v1659 = vpack.c.b16 %v1387, %v1386
  %v1660 = vpack.c.b16 %v1389, %v1388
  %v1661 = vpack.c.b16 %v1391, %v1390
  %v1662 = vpack.c.b16 %v1393, %v1392
  %v1663 = vpack.c.b16 %v1395, %v1394
  %v1664 = vpack.c.b16 %v1397, %v1396
  %v1665 = vpack.c.b16 %v1399, %v1398
  %v1666 = vpack.c.b16 %v1401, %v1400
  %v1667 = vpack.c.b16 %v1403, %v1402
  %v1668 = vpack.c.b16 %v1405, %v1404
  %v1669 = vpack.c.b16 %v1407, %v1406
  %v1670 = vpack.c.b16 %v1409, %v1408
  %v1671 = vpack.c.b16 %v1411, %v1410
  %v1672 = vpack.c.b16 %v1413, %v1412
  %v1673 = vpack.c.b16 %v1415, %v1414
  %v1674 = vpack.c.b16 %v1417, %v1416
  %v1675 = vpack.c.b16 %v1419, %v1418
  %v1676 = vpack.c.b16 %v1421, %v1420
  %v1677 = vpack.c.b16 %v1423, %v1422
  %v1678 = vpack.c.b16 %v1425, %v1424
  %v1679 = vpack.c.b16 %v1427, %v1426
  %v1680 = vpack.c.b16 %v1429, %v1428
  %v1681 = vpack.c.b16 %v1431, %v1430
  %v1682 = vpack.c.b16 %v1433, %v1432
  %v1683 = vpack.c.b16 %v1435, %v1434
  %v1684 = vpack.c.b16 %v1437, %v1436
  %v1685 = vpack.c.b16 %v1439, %v1438
  %v1686 = vpack.c.b16 %v1441, %v1440
  %v1687 = vpack.c.b16 %v1443, %v1442
  %v1688 = vpack.c.b16 %v1445, %v1444
  %v1689 = vpack.c.b16 %v1447, %v1446
  %v1690 = vpack.c.b16 %v1449, %v1448
  %v1691 = vpack.c.b16 %v1451, %v1450
  %v1692 = vpack.c.b16 %v1453, %v1452
  %v1693 = vpack.c.b16 %v1455, %v1454
  %v1694 = vpack.c.b16 %v1457, %v1456
  %v1695 = vpack.c.b16 %v1459, %v1458
  %v1696 = vpack.c.b16 %v1461, %v1460
  %v1697 = vpack.c.b16 %v1463, %v1462
  %v1698 = vpack.c.b16 %v1465, %v1464
  %v1699 = vpack.c.b16 %v1467, %v1466
  %v1700 = vpack.c.b16 %v1469, %v1468
  %v1701 = vpack.c.b16 %v1471, %v1470
  %v1702 = vpack.c.b16 %v1473, %v1472
  %v1703 = vpack.c.b16 %v1475, %v1474
  %v1704 = vpack.c.b16 %v1477, %v1476
  %v1705 = vpack.c.b16 %v1479, %v1478
  %v1706 = vpack.c.b16 %v1481, %v1480
  %v1707 = vpack.c.b16 %v1483, %v1482
  %v1708 = vpack.c.b16 %v1485, %v1484
  %v1709 = vpack.c.b16 %v1487, %v1486
  %v1710 = vpack.c.b16 %v1489, %v1488
  %v1711 = vpack.c.b16 %v1491, %v1490
  %v1712 = vpack.c.b16 %v1493, %v1492
  %v1713 = vpack.c.b16 %v1495, %v1494
  %v1714 = vpack.c.b16 %v1497, %v1496
  %v1715 = vpack.c.b16 %v1499, %v1498
  %v1716 = vpack.c.b16 %v1501, %v1500
  %v1717 = vpack.c.b16 %v1503, %v1502
  %v1718 = vpack.c.b16 %v1505, %v1504
  %v1719 = vpack.c.b16 %v1507, %v1506
  %v1720 = vpack.c.b16 %v1509, %v1508
  %v1721 = vpack.c.b16 %v1511, %v1510
  %v1722 = vpack.c.b16 %v1513, %v1512
  %v1723 = vpack.c.b16 %v1515, %v1514
  %v1724 = vpack.c.b16 %v1517, %v1516
  %v1725 = vpack.c.b16 %v1519, %v1518
  %v1726 = vpack.c.b16 %v1521, %v1520
  %v1727 = vpack.c.b16 %v1523, %v1522
  %v1728 = vpack.c.b16 %v1525, %v1524
  %v1729 = vpack.c.b16 %v1527, %v1526
  %v1730 = vpack.c.b16 %v1529, %v1528
  %v1731 = vpack.c.b16 %v1531, %v1530
  %1932 = vmatprep.subr.bf16.mxu0 0
  %1933 = vmatpush1.bf16.msra.mxu0 %v1539
  %1934 = vmatprep.subr.bf16.mxu0 0
  %1935 = vmatpush1.bf16.msra.mxu0 %v1538
  %1936 = vmatprep.subr.bf16.mxu0 0
  %1937 = vmatpush1.bf16.msra.mxu0 %v1537
  %1938 = vmatprep.subr.bf16.mxu0 0
  %1939 = vmatpush1.bf16.msra.mxu0 %v1536
  %1940 = vmatprep.subr.bf16.mxu0 0
  %1941 = vmatpush1.bf16.msra.mxu0 %v1535
  %1942 = vmatprep.subr.bf16.mxu0 0
  %1943 = vmatpush1.bf16.msra.mxu0 %v1534
  %1944 = vmatprep.subr.bf16.mxu0 0
  %1945 = vmatpush1.bf16.msra.mxu0 %v1533
  %1946 = vmatprep.subr.bf16.mxu0 0
  %1947 = vmatpush1.bf16.msra.mxu0 %v1532
  %1948 = vmatprep.subr.bf16.mxu0 0
  %1949 = vmatpush2.bf16.msra.mxu0 %v1547
  %1950 = vmatprep.subr.bf16.mxu0 0
  %1951 = vmatpush2.bf16.msra.mxu0 %v1546
  %1952 = vmatprep.subr.bf16.mxu0 0
  %1953 = vmatpush2.bf16.msra.mxu0 %v1545
  %1954 = vmatprep.subr.bf16.mxu0 0
  %1955 = vmatpush2.bf16.msra.mxu0 %v1544
  %1956 = vmatprep.subr.bf16.mxu0 0
  %1957 = vmatpush2.bf16.msra.mxu0 %v1543
  %1958 = vmatprep.subr.bf16.mxu0 0
  %1959 = vmatpush2.bf16.msra.mxu0 %v1542
  %1960 = vmatprep.subr.bf16.mxu0 0
  %1961 = vmatpush2.bf16.msra.mxu0 %v1541
  %1962 = vmatprep.subr.bf16.mxu0 0
  %1963 = vmatpush2.bf16.msra.mxu0 %v1540
  %1964 = vmatprep.mubr.bf16.mxu0 %v633
  %1965 = vmatmul.mubr.bf16.gmra.mxu0 %v632
  %v1966 = vpop.f32.mrf.mxu0
  %v1967 = vadd.f32 %v478, %v1966
  %v1968 = vpop.f32.mrf.mxu0
  %v1969 = vpop.f32.mrf.mxu0
  %v1970 = vadd.f32 %v478, %v1969
  %v1971 = vpop.f32.mrf.mxu0
  %1972 = vmatprep.mubr.bf16.mxu0 %v658
  %1973 = vmatmul.mubr.bf16.gmra.mxu0 %v657
  %v1974 = vpop.f32.mrf.mxu0
  %v1975 = vadd.f32 %v478, %v1974
  %v1976 = vpop.f32.mrf.mxu0
  %v1977 = vpop.f32.mrf.mxu0
  %v1978 = vadd.f32 %v478, %v1977
  %v1979 = vpop.f32.mrf.mxu0
  %1980 = vdwg.mxu0
  %1981 = vmatprep.subr.bf16.mxu0 0
  %1982 = vmatpush1.bf16.msra.mxu0 %v1555
  %1983 = vmatprep.subr.bf16.mxu0 0
  %1984 = vmatpush1.bf16.msra.mxu0 %v1554
  %1985 = vmatprep.subr.bf16.mxu0 0
  %1986 = vmatpush1.bf16.msra.mxu0 %v1553
  %1987 = vmatprep.subr.bf16.mxu0 0
  %1988 = vmatpush1.bf16.msra.mxu0 %v1552
  %1989 = vmatprep.subr.bf16.mxu0 0
  %1990 = vmatpush1.bf16.msra.mxu0 %v1551
  %1991 = vmatprep.subr.bf16.mxu0 0
  %1992 = vmatpush1.bf16.msra.mxu0 %v1550
  %1993 = vmatprep.subr.bf16.mxu0 0
  %1994 = vmatpush1.bf16.msra.mxu0 %v1549
  %1995 = vmatprep.subr.bf16.mxu0 0
  %1996 = vmatpush1.bf16.msra.mxu0 %v1548
  %1997 = vmatprep.subr.bf16.mxu0 0
  %1998 = vmatpush2.bf16.msra.mxu0 %v1563
  %1999 = vmatprep.subr.bf16.mxu0 0
  %2000 = vmatpush2.bf16.msra.mxu0 %v1562
  %2001 = vmatprep.subr.bf16.mxu0 0
  %2002 = vmatpush2.bf16.msra.mxu0 %v1561
  %2003 = vmatprep.subr.bf16.mxu0 0
  %2004 = vmatpush2.bf16.msra.mxu0 %v1560
  %2005 = vmatprep.subr.bf16.mxu0 0
  %2006 = vmatpush2.bf16.msra.mxu0 %v1559
  %2007 = vmatprep.subr.bf16.mxu0 0
  %2008 = vmatpush2.bf16.msra.mxu0 %v1558
  %2009 = vmatprep.subr.bf16.mxu0 0
  %2010 = vmatpush2.bf16.msra.mxu0 %v1557
  %2011 = vmatprep.subr.bf16.mxu0 0
  %2012 = vmatpush2.bf16.msra.mxu0 %v1556
  %2013 = vmatprep.mubr.bf16.mxu0 %v635
  %2014 = vmatmul.mubr.bf16.gmra.mxu0 %v634
  %v2015 = vpop.f32.mrf.mxu0
  %v2016 = vadd.f32 %v1967, %v2015
  %v2017 = vpop.f32.mrf.mxu0
  %v2018 = vpop.f32.mrf.mxu0
  %v2019 = vadd.f32 %v1970, %v2018
  %v2020 = vpop.f32.mrf.mxu0
  %2021 = vmatprep.mubr.bf16.mxu0 %v660
  %2022 = vmatmul.mubr.bf16.gmra.mxu0 %v659
  %v2023 = vpop.f32.mrf.mxu0
  %v2024 = vadd.f32 %v1975, %v2023
  %v2025 = vpop.f32.mrf.mxu0
  %v2026 = vpop.f32.mrf.mxu0
  %v2027 = vadd.f32 %v1978, %v2026
  %v2028 = vpop.f32.mrf.mxu0
  %2029 = vdwg.mxu0
  %2030 = vmatprep.subr.bf16.mxu0 0
  %2031 = vmatpush1.bf16.msra.mxu0 %v1571
  %2032 = vmatprep.subr.bf16.mxu0 0
  %2033 = vmatpush1.bf16.msra.mxu0 %v1570
  %2034 = vmatprep.subr.bf16.mxu0 0
  %2035 = vmatpush1.bf16.msra.mxu0 %v1569
  %2036 = vmatprep.subr.bf16.mxu0 0
  %2037 = vmatpush1.bf16.msra.mxu0 %v1568
  %2038 = vmatprep.subr.bf16.mxu0 0
  %2039 = vmatpush1.bf16.msra.mxu0 %v1567
  %2040 = vmatprep.subr.bf16.mxu0 0
  %2041 = vmatpush1.bf16.msra.mxu0 %v1566
  %2042 = vmatprep.subr.bf16.mxu0 0
  %2043 = vmatpush1.bf16.msra.mxu0 %v1565
  %2044 = vmatprep.subr.bf16.mxu0 0
  %2045 = vmatpush1.bf16.msra.mxu0 %v1564
  %2046 = vmatprep.subr.bf16.mxu0 0
  %2047 = vmatpush2.bf16.msra.mxu0 %v1579
  %2048 = vmatprep.subr.bf16.mxu0 0
  %2049 = vmatpush2.bf16.msra.mxu0 %v1578
  %2050 = vmatprep.subr.bf16.mxu0 0
  %2051 = vmatpush2.bf16.msra.mxu0 %v1577
  %2052 = vmatprep.subr.bf16.mxu0 0
  %2053 = vmatpush2.bf16.msra.mxu0 %v1576
  %2054 = vmatprep.subr.bf16.mxu0 0
  %2055 = vmatpush2.bf16.msra.mxu0 %v1575
  %2056 = vmatprep.subr.bf16.mxu0 0
  %2057 = vmatpush2.bf16.msra.mxu0 %v1574
  %2058 = vmatprep.subr.bf16.mxu0 0
  %2059 = vmatpush2.bf16.msra.mxu0 %v1573
  %2060 = vmatprep.subr.bf16.mxu0 0
  %2061 = vmatpush2.bf16.msra.mxu0 %v1572
  %2062 = vmatprep.mubr.bf16.mxu0 %v637
  %2063 = vmatmul.mubr.bf16.gmra.mxu0 %v636
  %v2064 = vpop.f32.mrf.mxu0
  %v2065 = vadd.f32 %v2016, %v2064
  %v2066 = vpop.f32.mrf.mxu0
  %v2067 = vpop.f32.mrf.mxu0
  %v2068 = vadd.f32 %v2019, %v2067
  %v2069 = vpop.f32.mrf.mxu0
  %2070 = vmatprep.mubr.bf16.mxu0 %v662
  %2071 = vmatmul.mubr.bf16.gmra.mxu0 %v661
  %v2072 = vpop.f32.mrf.mxu0
  %v2073 = vadd.f32 %v2024, %v2072
  %v2074 = vpop.f32.mrf.mxu0
  %v2075 = vpop.f32.mrf.mxu0
  %v2076 = vadd.f32 %v2027, %v2075
  %v2077 = vpop.f32.mrf.mxu0
  %2078 = vdwg.mxu0
  %2079 = vmatprep.subr.bf16.mxu0 0
  %2080 = vmatpush1.bf16.msra.mxu0 %v1587
  %2081 = vmatprep.subr.bf16.mxu0 0
  %2082 = vmatpush1.bf16.msra.mxu0 %v1586
  %2083 = vmatprep.subr.bf16.mxu0 0
  %2084 = vmatpush1.bf16.msra.mxu0 %v1585
  %2085 = vmatprep.subr.bf16.mxu0 0
  %2086 = vmatpush1.bf16.msra.mxu0 %v1584
  %2087 = vmatprep.subr.bf16.mxu0 0
  %2088 = vmatpush1.bf16.msra.mxu0 %v1583
  %2089 = vmatprep.subr.bf16.mxu0 0
  %2090 = vmatpush1.bf16.msra.mxu0 %v1582
  %2091 = vmatprep.subr.bf16.mxu0 0
  %2092 = vmatpush1.bf16.msra.mxu0 %v1581
  %2093 = vmatprep.subr.bf16.mxu0 0
  %2094 = vmatpush1.bf16.msra.mxu0 %v1580
  %2095 = vmatprep.subr.bf16.mxu0 0
  %2096 = vmatpush2.bf16.msra.mxu0 %v1595
  %2097 = vmatprep.subr.bf16.mxu0 0
  %2098 = vmatpush2.bf16.msra.mxu0 %v1594
  %2099 = vmatprep.subr.bf16.mxu0 0
  %2100 = vmatpush2.bf16.msra.mxu0 %v1593
  %2101 = vmatprep.subr.bf16.mxu0 0
  %2102 = vmatpush2.bf16.msra.mxu0 %v1592
  %2103 = vmatprep.subr.bf16.mxu0 0
  %2104 = vmatpush2.bf16.msra.mxu0 %v1591
  %2105 = vmatprep.subr.bf16.mxu0 0
  %2106 = vmatpush2.bf16.msra.mxu0 %v1590
  %2107 = vmatprep.subr.bf16.mxu0 0
  %2108 = vmatpush2.bf16.msra.mxu0 %v1589
  %2109 = vmatprep.subr.bf16.mxu0 0
  %2110 = vmatpush2.bf16.msra.mxu0 %v1588
  %2111 = vmatprep.mubr.bf16.mxu0 %v639
  %2112 = vmatmul.mubr.bf16.gmra.mxu0 %v638
  %v2113 = vpop.f32.mrf.mxu0
  %v2114 = vadd.f32 %v2065, %v2113
  %v2115 = vpop.f32.mrf.mxu0
  %v2116 = vpop.f32.mrf.mxu0
  %v2117 = vadd.f32 %v2068, %v2116
  %v2118 = vpop.f32.mrf.mxu0
  %2119 = vmatprep.mubr.bf16.mxu0 %v664
  %2120 = vmatmul.mubr.bf16.gmra.mxu0 %v663
  %v2121 = vpop.f32.mrf.mxu0
  %v2122 = vadd.f32 %v2073, %v2121
  %v2123 = vpop.f32.mrf.mxu0
  %v2124 = vpop.f32.mrf.mxu0
  %v2125 = vadd.f32 %v2076, %v2124
  %v2126 = vpop.f32.mrf.mxu0
  %2127 = vdwg.mxu0
  %2128 = vmatprep.subr.bf16.mxu0 0
  %2129 = vmatpush1.bf16.msra.mxu0 %v1603
  %2130 = vmatprep.subr.bf16.mxu0 0
  %2131 = vmatpush1.bf16.msra.mxu0 %v1602
  %2132 = vmatprep.subr.bf16.mxu0 0
  %2133 = vmatpush1.bf16.msra.mxu0 %v1601
  %2134 = vmatprep.subr.bf16.mxu0 0
  %2135 = vmatpush1.bf16.msra.mxu0 %v1600
  %2136 = vmatprep.subr.bf16.mxu0 0
  %2137 = vmatpush1.bf16.msra.mxu0 %v1599
  %2138 = vmatprep.subr.bf16.mxu0 0
  %2139 = vmatpush1.bf16.msra.mxu0 %v1598
  %2140 = vmatprep.subr.bf16.mxu0 0
  %2141 = vmatpush1.bf16.msra.mxu0 %v1597
  %2142 = vmatprep.subr.bf16.mxu0 0
  %2143 = vmatpush1.bf16.msra.mxu0 %v1596
  %2144 = vmatprep.subr.bf16.mxu0 0
  %2145 = vmatpush2.bf16.msra.mxu0 %v1611
  %2146 = vmatprep.subr.bf16.mxu0 0
  %2147 = vmatpush2.bf16.msra.mxu0 %v1610
  %2148 = vmatprep.subr.bf16.mxu0 0
  %2149 = vmatpush2.bf16.msra.mxu0 %v1609
  %2150 = vmatprep.subr.bf16.mxu0 0
  %2151 = vmatpush2.bf16.msra.mxu0 %v1608
  %2152 = vmatprep.subr.bf16.mxu0 0
  %2153 = vmatpush2.bf16.msra.mxu0 %v1607
  %2154 = vmatprep.subr.bf16.mxu0 0
  %2155 = vmatpush2.bf16.msra.mxu0 %v1606
  %2156 = vmatprep.subr.bf16.mxu0 0
  %2157 = vmatpush2.bf16.msra.mxu0 %v1605
  %2158 = vmatprep.subr.bf16.mxu0 0
  %2159 = vmatpush2.bf16.msra.mxu0 %v1604
  %2160 = vmatprep.mubr.bf16.mxu0 %v641
  %2161 = vmatmul.mubr.bf16.gmra.mxu0 %v640
  %v2162 = vpop.f32.mrf.mxu0
  %v2163 = vadd.f32 %v2114, %v2162
  %v2164 = vpop.f32.mrf.mxu0
  %v2165 = vpop.f32.mrf.mxu0
  %v2166 = vadd.f32 %v2117, %v2165
  %v2167 = vpop.f32.mrf.mxu0
  %2168 = vmatprep.mubr.bf16.mxu0 %v666
  %2169 = vmatmul.mubr.bf16.gmra.mxu0 %v665
  %v2170 = vpop.f32.mrf.mxu0
  %v2171 = vadd.f32 %v2122, %v2170
  %v2172 = vpop.f32.mrf.mxu0
  %v2173 = vpop.f32.mrf.mxu0
  %v2174 = vadd.f32 %v2125, %v2173
  %v2175 = vpop.f32.mrf.mxu0
  %2176 = vdwg.mxu0
  %2177 = vmatprep.subr.bf16.mxu0 0
  %2178 = vmatpush1.bf16.msra.mxu0 %v1619
  %2179 = vmatprep.subr.bf16.mxu0 0
  %2180 = vmatpush1.bf16.msra.mxu0 %v1618
  %2181 = vmatprep.subr.bf16.mxu0 0
  %2182 = vmatpush1.bf16.msra.mxu0 %v1617
  %2183 = vmatprep.subr.bf16.mxu0 0
  %2184 = vmatpush1.bf16.msra.mxu0 %v1616
  %2185 = vmatprep.subr.bf16.mxu0 0
  %2186 = vmatpush1.bf16.msra.mxu0 %v1615
  %2187 = vmatprep.subr.bf16.mxu0 0
  %2188 = vmatpush1.bf16.msra.mxu0 %v1614
  %2189 = vmatprep.subr.bf16.mxu0 0
  %2190 = vmatpush1.bf16.msra.mxu0 %v1613
  %2191 = vmatprep.subr.bf16.mxu0 0
  %2192 = vmatpush1.bf16.msra.mxu0 %v1612
  %2193 = vmatprep.subr.bf16.mxu0 0
  %2194 = vmatpush2.bf16.msra.mxu0 %v1627
  %2195 = vmatprep.subr.bf16.mxu0 0
  %2196 = vmatpush2.bf16.msra.mxu0 %v1626
  %2197 = vmatprep.subr.bf16.mxu0 0
  %2198 = vmatpush2.bf16.msra.mxu0 %v1625
  %2199 = vmatprep.subr.bf16.mxu0 0
  %2200 = vmatpush2.bf16.msra.mxu0 %v1624
  %2201 = vmatprep.subr.bf16.mxu0 0
  %2202 = vmatpush2.bf16.msra.mxu0 %v1623
  %2203 = vmatprep.subr.bf16.mxu0 0
  %2204 = vmatpush2.bf16.msra.mxu0 %v1622
  %2205 = vmatprep.subr.bf16.mxu0 0
  %2206 = vmatpush2.bf16.msra.mxu0 %v1621
  %2207 = vmatprep.subr.bf16.mxu0 0
  %2208 = vmatpush2.bf16.msra.mxu0 %v1620
  %2209 = vmatprep.mubr.bf16.mxu0 %v643
  %2210 = vmatmul.mubr.bf16.gmra.mxu0 %v642
  %v2211 = vpop.f32.mrf.mxu0
  %v2212 = vadd.f32 %v2163, %v2211
  %v2213 = vpop.f32.mrf.mxu0
  %v2214 = vpop.f32.mrf.mxu0
  %v2215 = vadd.f32 %v2166, %v2214
  %v2216 = vpop.f32.mrf.mxu0
  %2217 = vmatprep.mubr.bf16.mxu0 %v668
  %2218 = vmatmul.mubr.bf16.gmra.mxu0 %v667
  %v2219 = vpop.f32.mrf.mxu0
  %v2220 = vadd.f32 %v2171, %v2219
  %v2221 = vpop.f32.mrf.mxu0
  %v2222 = vpop.f32.mrf.mxu0
  %v2223 = vadd.f32 %v2174, %v2222
  %v2224 = vpop.f32.mrf.mxu0
  %2225 = vdwg.mxu0
  %2226 = vmatprep.subr.bf16.mxu0 0
  %2227 = vmatpush1.bf16.msra.mxu0 %v1635
  %2228 = vmatprep.subr.bf16.mxu0 0
  %2229 = vmatpush1.bf16.msra.mxu0 %v1634
  %2230 = vmatprep.subr.bf16.mxu0 0
  %2231 = vmatpush1.bf16.msra.mxu0 %v1633
  %2232 = vmatprep.subr.bf16.mxu0 0
  %2233 = vmatpush1.bf16.msra.mxu0 %v1632
  %2234 = vmatprep.subr.bf16.mxu0 0
  %2235 = vmatpush1.bf16.msra.mxu0 %v1631
  %2236 = vmatprep.subr.bf16.mxu0 0
  %2237 = vmatpush1.bf16.msra.mxu0 %v1630
  %2238 = vmatprep.subr.bf16.mxu0 0
  %2239 = vmatpush1.bf16.msra.mxu0 %v1629
  %2240 = vmatprep.subr.bf16.mxu0 0
  %2241 = vmatpush1.bf16.msra.mxu0 %v1628
  %2242 = vmatprep.subr.bf16.mxu0 0
  %2243 = vmatpush2.bf16.msra.mxu0 %v1643
  %2244 = vmatprep.subr.bf16.mxu0 0
  %2245 = vmatpush2.bf16.msra.mxu0 %v1642
  %2246 = vmatprep.subr.bf16.mxu0 0
  %2247 = vmatpush2.bf16.msra.mxu0 %v1641
  %2248 = vmatprep.subr.bf16.mxu0 0
  %2249 = vmatpush2.bf16.msra.mxu0 %v1640
  %2250 = vmatprep.subr.bf16.mxu0 0
  %2251 = vmatpush2.bf16.msra.mxu0 %v1639
  %2252 = vmatprep.subr.bf16.mxu0 0
  %2253 = vmatpush2.bf16.msra.mxu0 %v1638
  %2254 = vmatprep.subr.bf16.mxu0 0
  %2255 = vmatpush2.bf16.msra.mxu0 %v1637
  %2256 = vmatprep.subr.bf16.mxu0 0
  %2257 = vmatpush2.bf16.msra.mxu0 %v1636
  %2258 = vmatprep.mubr.bf16.mxu0 %v645
  %2259 = vmatmul.mubr.bf16.gmra.mxu0 %v644
  %v2260 = vpop.f32.mrf.mxu0
  %v2261 = vadd.f32 %v2212, %v2260
  %v2262 = vpop.f32.mrf.mxu0
  %v2263 = vpop.f32.mrf.mxu0
  %v2264 = vadd.f32 %v2215, %v2263
  %v2265 = vpop.f32.mrf.mxu0
  %2266 = vmatprep.mubr.bf16.mxu0 %v670
  %2267 = vmatmul.mubr.bf16.gmra.mxu0 %v669
  %v2268 = vpop.f32.mrf.mxu0
  %v2269 = vadd.f32 %v2220, %v2268
  %v2270 = vpop.f32.mrf.mxu0
  %v2271 = vpop.f32.mrf.mxu0
  %v2272 = vadd.f32 %v2223, %v2271
  %v2273 = vpop.f32.mrf.mxu0
  %2274 = vdwg.mxu0
  %2275 = vmatprep.subr.bf16.mxu0 0
  %2276 = vmatpush1.bf16.msra.mxu0 %v1651
  %2277 = vmatprep.subr.bf16.mxu0 0
  %2278 = vmatpush1.bf16.msra.mxu0 %v1650
  %2279 = vmatprep.subr.bf16.mxu0 0
  %2280 = vmatpush1.bf16.msra.mxu0 %v1649
  %2281 = vmatprep.subr.bf16.mxu0 0
  %2282 = vmatpush1.bf16.msra.mxu0 %v1648
  %2283 = vmatprep.subr.bf16.mxu0 0
  %2284 = vmatpush1.bf16.msra.mxu0 %v1647
  %2285 = vmatprep.subr.bf16.mxu0 0
  %2286 = vmatpush1.bf16.msra.mxu0 %v1646
  %2287 = vmatprep.subr.bf16.mxu0 0
  %2288 = vmatpush1.bf16.msra.mxu0 %v1645
  %2289 = vmatprep.subr.bf16.mxu0 0
  %2290 = vmatpush1.bf16.msra.mxu0 %v1644
  %2291 = vmatprep.subr.bf16.mxu0 0
  %2292 = vmatpush2.bf16.msra.mxu0 %v1659
  %2293 = vmatprep.subr.bf16.mxu0 0
  %2294 = vmatpush2.bf16.msra.mxu0 %v1658
  %2295 = vmatprep.subr.bf16.mxu0 0
  %2296 = vmatpush2.bf16.msra.mxu0 %v1657
  %2297 = vmatprep.subr.bf16.mxu0 0
  %2298 = vmatpush2.bf16.msra.mxu0 %v1656
  %2299 = vmatprep.subr.bf16.mxu0 0
  %2300 = vmatpush2.bf16.msra.mxu0 %v1655
  %2301 = vmatprep.subr.bf16.mxu0 0
  %2302 = vmatpush2.bf16.msra.mxu0 %v1654
  %2303 = vmatprep.subr.bf16.mxu0 0
  %2304 = vmatpush2.bf16.msra.mxu0 %v1653
  %2305 = vmatprep.subr.bf16.mxu0 0
  %2306 = vmatpush2.bf16.msra.mxu0 %v1652
  %2307 = vmatprep.mubr.bf16.mxu0 %v647
  %2308 = vmatmul.mubr.bf16.gmra.mxu0 %v646
  %v2309 = vpop.f32.mrf.mxu0
  %v2310 = vadd.f32 %v2261, %v2309
  %v2311 = vpop.f32.mrf.mxu0
  %v2312 = vpop.f32.mrf.mxu0
  %v2313 = vadd.f32 %v2264, %v2312
  %v2314 = vpop.f32.mrf.mxu0
  %2315 = vmatprep.mubr.bf16.mxu0 %v672
  %2316 = vmatmul.mubr.bf16.gmra.mxu0 %v671
  %v2317 = vpop.f32.mrf.mxu0
  %v2318 = vadd.f32 %v2269, %v2317
  %v2319 = vpop.f32.mrf.mxu0
  %v2320 = vpop.f32.mrf.mxu0
  %v2321 = vadd.f32 %v2272, %v2320
  %v2322 = vpop.f32.mrf.mxu0
  %2323 = vdwg.mxu0
  %2324 = vmatprep.subr.bf16.mxu0 0
  %2325 = vmatpush1.bf16.msra.mxu0 %v1667
  %2326 = vmatprep.subr.bf16.mxu0 0
  %2327 = vmatpush1.bf16.msra.mxu0 %v1666
  %2328 = vmatprep.subr.bf16.mxu0 0
  %2329 = vmatpush1.bf16.msra.mxu0 %v1665
  %2330 = vmatprep.subr.bf16.mxu0 0
  %2331 = vmatpush1.bf16.msra.mxu0 %v1664
  %2332 = vmatprep.subr.bf16.mxu0 0
  %2333 = vmatpush1.bf16.msra.mxu0 %v1663
  %2334 = vmatprep.subr.bf16.mxu0 0
  %2335 = vmatpush1.bf16.msra.mxu0 %v1662
  %2336 = vmatprep.subr.bf16.mxu0 0
  %2337 = vmatpush1.bf16.msra.mxu0 %v1661
  %2338 = vmatprep.subr.bf16.mxu0 0
  %2339 = vmatpush1.bf16.msra.mxu0 %v1660
  %2340 = vmatprep.subr.bf16.mxu0 0
  %2341 = vmatpush2.bf16.msra.mxu0 %v1675
  %2342 = vmatprep.subr.bf16.mxu0 0
  %2343 = vmatpush2.bf16.msra.mxu0 %v1674
  %2344 = vmatprep.subr.bf16.mxu0 0
  %2345 = vmatpush2.bf16.msra.mxu0 %v1673
  %2346 = vmatprep.subr.bf16.mxu0 0
  %2347 = vmatpush2.bf16.msra.mxu0 %v1672
  %2348 = vmatprep.subr.bf16.mxu0 0
  %2349 = vmatpush2.bf16.msra.mxu0 %v1671
  %2350 = vmatprep.subr.bf16.mxu0 0
  %2351 = vmatpush2.bf16.msra.mxu0 %v1670
  %2352 = vmatprep.subr.bf16.mxu0 0
  %2353 = vmatpush2.bf16.msra.mxu0 %v1669
  %2354 = vmatprep.subr.bf16.mxu0 0
  %2355 = vmatpush2.bf16.msra.mxu0 %v1668
  %2356 = vmatprep.mubr.bf16.mxu0 %v649
  %2357 = vmatmul.mubr.bf16.gmra.mxu0 %v648
  %v2358 = vpop.f32.mrf.mxu0
  %v2359 = vadd.f32 %v2310, %v2358
  %v2360 = vpop.f32.mrf.mxu0
  %v2361 = vpop.f32.mrf.mxu0
  %v2362 = vadd.f32 %v2313, %v2361
  %v2363 = vpop.f32.mrf.mxu0
  %2364 = vmatprep.mubr.bf16.mxu0 %v674
  %2365 = vmatmul.mubr.bf16.gmra.mxu0 %v673
  %v2366 = vpop.f32.mrf.mxu0
  %v2367 = vadd.f32 %v2318, %v2366
  %v2368 = vpop.f32.mrf.mxu0
  %v2369 = vpop.f32.mrf.mxu0
  %v2370 = vadd.f32 %v2321, %v2369
  %v2371 = vpop.f32.mrf.mxu0
  %2372 = vdwg.mxu0
  %2373 = vmatprep.subr.bf16.mxu0 0
  %2374 = vmatpush1.bf16.msra.mxu0 %v1683
  %2375 = vmatprep.subr.bf16.mxu0 0
  %2376 = vmatpush1.bf16.msra.mxu0 %v1682
  %2377 = vmatprep.subr.bf16.mxu0 0
  %2378 = vmatpush1.bf16.msra.mxu0 %v1681
  %2379 = vmatprep.subr.bf16.mxu0 0
  %2380 = vmatpush1.bf16.msra.mxu0 %v1680
  %2381 = vmatprep.subr.bf16.mxu0 0
  %2382 = vmatpush1.bf16.msra.mxu0 %v1679
  %2383 = vmatprep.subr.bf16.mxu0 0
  %2384 = vmatpush1.bf16.msra.mxu0 %v1678
  %2385 = vmatprep.subr.bf16.mxu0 0
  %2386 = vmatpush1.bf16.msra.mxu0 %v1677
  %2387 = vmatprep.subr.bf16.mxu0 0
  %2388 = vmatpush1.bf16.msra.mxu0 %v1676
  %2389 = vmatprep.subr.bf16.mxu0 0
  %2390 = vmatpush2.bf16.msra.mxu0 %v1691
  %2391 = vmatprep.subr.bf16.mxu0 0
  %2392 = vmatpush2.bf16.msra.mxu0 %v1690
  %2393 = vmatprep.subr.bf16.mxu0 0
  %2394 = vmatpush2.bf16.msra.mxu0 %v1689
  %2395 = vmatprep.subr.bf16.mxu0 0
  %2396 = vmatpush2.bf16.msra.mxu0 %v1688
  %2397 = vmatprep.subr.bf16.mxu0 0
  %2398 = vmatpush2.bf16.msra.mxu0 %v1687
  %2399 = vmatprep.subr.bf16.mxu0 0
  %2400 = vmatpush2.bf16.msra.mxu0 %v1686
  %2401 = vmatprep.subr.bf16.mxu0 0
  %2402 = vmatpush2.bf16.msra.mxu0 %v1685
  %2403 = vmatprep.subr.bf16.mxu0 0
  %2404 = vmatpush2.bf16.msra.mxu0 %v1684
  %2405 = vmatprep.mubr.bf16.mxu0 %v651
  %2406 = vmatmul.mubr.bf16.gmra.mxu0 %v650
  %v2407 = vpop.f32.mrf.mxu0
  %v2408 = vadd.f32 %v2359, %v2407
  %v2409 = vpop.f32.mrf.mxu0
  %v2410 = vpop.f32.mrf.mxu0
  %v2411 = vadd.f32 %v2362, %v2410
  %v2412 = vpop.f32.mrf.mxu0
  %2413 = vmatprep.mubr.bf16.mxu0 %v676
  %2414 = vmatmul.mubr.bf16.gmra.mxu0 %v675
  %v2415 = vpop.f32.mrf.mxu0
  %v2416 = vadd.f32 %v2367, %v2415
  %v2417 = vpop.f32.mrf.mxu0
  %v2418 = vpop.f32.mrf.mxu0
  %v2419 = vadd.f32 %v2370, %v2418
  %v2420 = vpop.f32.mrf.mxu0
  %2421 = vdwg.mxu0
  %2422 = vmatprep.subr.bf16.mxu0 0
  %2423 = vmatpush1.bf16.msra.mxu0 %v1699
  %2424 = vmatprep.subr.bf16.mxu0 0
  %2425 = vmatpush1.bf16.msra.mxu0 %v1698
  %2426 = vmatprep.subr.bf16.mxu0 0
  %2427 = vmatpush1.bf16.msra.mxu0 %v1697
  %2428 = vmatprep.subr.bf16.mxu0 0
  %2429 = vmatpush1.bf16.msra.mxu0 %v1696
  %2430 = vmatprep.subr.bf16.mxu0 0
  %2431 = vmatpush1.bf16.msra.mxu0 %v1695
  %2432 = vmatprep.subr.bf16.mxu0 0
  %2433 = vmatpush1.bf16.msra.mxu0 %v1694
  %2434 = vmatprep.subr.bf16.mxu0 0
  %2435 = vmatpush1.bf16.msra.mxu0 %v1693
  %2436 = vmatprep.subr.bf16.mxu0 0
  %2437 = vmatpush1.bf16.msra.mxu0 %v1692
  %2438 = vmatprep.subr.bf16.mxu0 0
  %2439 = vmatpush2.bf16.msra.mxu0 %v1707
  %2440 = vmatprep.subr.bf16.mxu0 0
  %2441 = vmatpush2.bf16.msra.mxu0 %v1706
  %2442 = vmatprep.subr.bf16.mxu0 0
  %2443 = vmatpush2.bf16.msra.mxu0 %v1705
  %2444 = vmatprep.subr.bf16.mxu0 0
  %2445 = vmatpush2.bf16.msra.mxu0 %v1704
  %2446 = vmatprep.subr.bf16.mxu0 0
  %2447 = vmatpush2.bf16.msra.mxu0 %v1703
  %2448 = vmatprep.subr.bf16.mxu0 0
  %2449 = vmatpush2.bf16.msra.mxu0 %v1702
  %2450 = vmatprep.subr.bf16.mxu0 0
  %2451 = vmatpush2.bf16.msra.mxu0 %v1701
  %2452 = vmatprep.subr.bf16.mxu0 0
  %2453 = vmatpush2.bf16.msra.mxu0 %v1700
  %2454 = vmatprep.mubr.bf16.mxu0 %v653
  %2455 = vmatmul.mubr.bf16.gmra.mxu0 %v652
  %v2456 = vpop.f32.mrf.mxu0
  %v2457 = vadd.f32 %v2408, %v2456
  %v2458 = vpop.f32.mrf.mxu0
  %v2459 = vpop.f32.mrf.mxu0
  %v2460 = vadd.f32 %v2411, %v2459
  %v2461 = vpop.f32.mrf.mxu0
  %2462 = vmatprep.mubr.bf16.mxu0 %v678
  %2463 = vmatmul.mubr.bf16.gmra.mxu0 %v677
  %v2464 = vpop.f32.mrf.mxu0
  %v2465 = vadd.f32 %v2416, %v2464
  %v2466 = vpop.f32.mrf.mxu0
  %v2467 = vpop.f32.mrf.mxu0
  %v2468 = vadd.f32 %v2419, %v2467
  %v2469 = vpop.f32.mrf.mxu0
  %2470 = vdwg.mxu0
  %2471 = vmatprep.subr.bf16.mxu0 0
  %2472 = vmatpush1.bf16.msra.mxu0 %v1715
  %2473 = vmatprep.subr.bf16.mxu0 0
  %2474 = vmatpush1.bf16.msra.mxu0 %v1714
  %2475 = vmatprep.subr.bf16.mxu0 0
  %2476 = vmatpush1.bf16.msra.mxu0 %v1713
  %2477 = vmatprep.subr.bf16.mxu0 0
  %2478 = vmatpush1.bf16.msra.mxu0 %v1712
  %2479 = vmatprep.subr.bf16.mxu0 0
  %2480 = vmatpush1.bf16.msra.mxu0 %v1711
  %2481 = vmatprep.subr.bf16.mxu0 0
  %2482 = vmatpush1.bf16.msra.mxu0 %v1710
  %2483 = vmatprep.subr.bf16.mxu0 0
  %2484 = vmatpush1.bf16.msra.mxu0 %v1709
  %2485 = vmatprep.subr.bf16.mxu0 0
  %2486 = vmatpush1.bf16.msra.mxu0 %v1708
  %2487 = vmatprep.subr.bf16.mxu0 0
  %2488 = vmatpush2.bf16.msra.mxu0 %v1723
  %2489 = vmatprep.subr.bf16.mxu0 0
  %2490 = vmatpush2.bf16.msra.mxu0 %v1722
  %2491 = vmatprep.subr.bf16.mxu0 0
  %2492 = vmatpush2.bf16.msra.mxu0 %v1721
  %2493 = vmatprep.subr.bf16.mxu0 0
  %2494 = vmatpush2.bf16.msra.mxu0 %v1720
  %2495 = vmatprep.subr.bf16.mxu0 0
  %2496 = vmatpush2.bf16.msra.mxu0 %v1719
  %2497 = vmatprep.subr.bf16.mxu0 0
  %2498 = vmatpush2.bf16.msra.mxu0 %v1718
  %2499 = vmatprep.subr.bf16.mxu0 0
  %2500 = vmatpush2.bf16.msra.mxu0 %v1717
  %2501 = vmatprep.subr.bf16.mxu0 0
  %2502 = vmatpush2.bf16.msra.mxu0 %v1716
  %2503 = vmatprep.mubr.bf16.mxu0 %v655
  %2504 = vmatmul.mubr.bf16.gmra.mxu0 %v654
  %v2505 = vpop.f32.mrf.mxu0
  %v2506 = vadd.f32 %v2457, %v2505
  %v2507 = vpop.f32.mrf.mxu0
  %v2508 = vpop.f32.mrf.mxu0
  %v2509 = vadd.f32 %v2460, %v2508
  %v2510 = vpop.f32.mrf.mxu0
  %2511 = vmatprep.mubr.bf16.mxu0 %v680
  %2512 = vmatmul.mubr.bf16.gmra.mxu0 %v679
  %v2513 = vpop.f32.mrf.mxu0
  %v2514 = vadd.f32 %v2465, %v2513
  %v2515 = vpop.f32.mrf.mxu0
  %v2516 = vpop.f32.mrf.mxu0
  %v2517 = vadd.f32 %v2468, %v2516
  %v2518 = vpop.f32.mrf.mxu0
  %2519 = vdwg.mxu0
  %2520 = vmatprep.subr.bf16.mxu0 0
  %2521 = vmatpush1.bf16.msra.mxu0 %v1731
  %2522 = vmatprep.subr.bf16.mxu0 0
  %2523 = vmatpush1.bf16.msra.mxu0 %v1730
  %2524 = vmatprep.subr.bf16.mxu0 0
  %2525 = vmatpush1.bf16.msra.mxu0 %v1729
  %2526 = vmatprep.subr.bf16.mxu0 0
  %2527 = vmatpush1.bf16.msra.mxu0 %v1728
  %2528 = vmatprep.subr.bf16.mxu0 0
  %2529 = vmatpush1.bf16.msra.mxu0 %v1727
  %2530 = vmatprep.subr.bf16.mxu0 0
  %2531 = vmatpush1.bf16.msra.mxu0 %v1726
  %2532 = vmatprep.subr.bf16.mxu0 0
  %2533 = vmatpush1.bf16.msra.mxu0 %v1725
  %2534 = vmatprep.subr.bf16.mxu0 0
  %2535 = vmatpush1.bf16.msra.mxu0 %v1724
  %2536 = vmatprep.subr.bf16.mxu0 0
  %2537 = vmatpush2.bf16.msra.mxu0 0
  %2538 = vmatprep.subr.bf16.mxu0 0
  %2539 = vmatpush2.bf16.msra.mxu0 0
  %2540 = vmatprep.subr.bf16.mxu0 0
  %2541 = vmatpush2.bf16.msra.mxu0 0
  %2542 = vmatprep.subr.bf16.mxu0 0
  %2543 = vmatpush2.bf16.msra.mxu0 0
  %2544 = vmatprep.subr.bf16.mxu0 0
  %2545 = vmatpush2.bf16.msra.mxu0 0
  %2546 = vmatprep.subr.bf16.mxu0 0
  %2547 = vmatpush2.bf16.msra.mxu0 0
  %2548 = vmatprep.subr.bf16.mxu0 0
  %2549 = vmatpush2.bf16.msra.mxu0 0
  %2550 = vmatprep.subr.bf16.mxu0 0
  %2551 = vmatpush2.bf16.msra.mxu0 0
  %2552 = vmatprep.mubr.bf16.mxu0 0
  %2553 = vmatmul.mubr.bf16.gmra.mxu0 %v656
  %v2554 = vpop.f32.mrf.mxu0
  %v2555 = vadd.f32 %v2506, %v2554
  %v2556 = vpop.f32.mrf.mxu0
  %v2557 = vpop.f32.mrf.mxu0
  %v2558 = vadd.f32 %v2509, %v2557
  %v2559 = vpop.f32.mrf.mxu0
  %2560 = vmatprep.mubr.bf16.mxu0 0
  %2561 = vmatmul.mubr.bf16.gmra.mxu0 %v681
  %v2562 = vpop.f32.mrf.mxu0
  %v2563 = vadd.f32 %v2514, %v2562
  %v2564 = vpop.f32.mrf.mxu0
  %v2565 = vpop.f32.mrf.mxu0
  %v2566 = vadd.f32 %v2517, %v2565
  %v2567 = vpop.f32.mrf.mxu0
  %2568 = vdwg.mxu0
  %v2569 = vmax.f32 %v2555, 0.0
  %v2570 = vmax.f32 %v2558, 0.0
  %v2571 = vmax.f32 %v2563, 0.0
  %v2572 = vmax.f32 %v2566, 0.0
  %v2573 = vpack.c.bf16 %v2570, %v2569
  %v2574 = vpack.c.bf16 %v2572, %v2571
  %v2575 = vld [vmem:[%s3] sm:$0xf]
  %v2576 = vld [vmem:[%s3 + $0x4] sm:$0xf]
  %v2577 = vld [vmem:[%s3 + $0x8] sm:$0xf]
  %v2578 = vld [vmem:[%s3 + $0xc] sm:$0xf]
  %v2579 = vld [vmem:[%s3 + $0x10] sm:$0xf]
  %v2580 = vld [vmem:[%s3 + $0x14] sm:$0xf]
  %v2581 = vld [vmem:[%s3 + $0x18] sm:$0xf]
  %v2582 = vld [vmem:[%s3 + $0x1c] sm:$0xf]
  %v2583 = vld [vmem:[%s3 + $0x20] sm:$0xf]
  %v2584 = vld [vmem:[%s3 + $0x24] sm:$0xf]
  %v2585 = vld [vmem:[%s3 + $0x28] sm:$0xf]
  %v2586 = vld [vmem:[%s3 + $0x2c] sm:$0xf]
  %v2587 = vld [vmem:[%s3 + $0x30] sm:$0xf]
  %v2588 = vld [vmem:[%s3 + $0x34] sm:$0xf]
  %v2589 = vld [vmem:[%s3 + $0x38] sm:$0xf]
  %v2590 = vld [vmem:[%s3 + $0x3c] sm:$0xf]
  %v2591 = vld [vmem:[%s4] sm:$0x1]
  %v2593 = vlaneseq
  %v2594 = vshrl.u32 %v2593, 7
  %v2595 = vsub.s32 0, %v2594
  %v2596 = vrot.slane %v2591, %v2595
  %v2614 = vunpack.c.l.b16 %v2575
  %v2615 = vunpack.c.l.b16 %v2576
  %v2616 = vunpack.c.l.b16 %v2577
  %v2617 = vunpack.c.l.b16 %v2578
  %v2618 = vunpack.c.l.b16 %v2579
  %v2619 = vunpack.c.l.b16 %v2580
  %v2620 = vunpack.c.l.b16 %v2581
  %v2621 = vunpack.c.l.b16 %v2582
  %v2622 = vunpack.c.l.b16 %v2583
  %v2623 = vunpack.c.l.b16 %v2584
  %v2624 = vunpack.c.l.b16 %v2585
  %v2625 = vunpack.c.l.b16 %v2586
  %v2626 = vunpack.c.l.b16 %v2587
  %v2627 = vunpack.c.l.b16 %v2588
  %v2628 = vunpack.c.l.b16 %v2589
  %v2629 = vunpack.c.l.b16 %v2590
  %v2630 = vpack.c.b16 %v2615, %v2614
  %v2631 = vpack.c.b16 %v2617, %v2616
  %v2632 = vpack.c.b16 %v2619, %v2618
  %v2633 = vpack.c.b16 %v2621, %v2620
  %v2634 = vpack.c.b16 %v2623, %v2622
  %v2635 = vpack.c.b16 %v2625, %v2624
  %v2636 = vpack.c.b16 %v2627, %v2626
  %v2637 = vpack.c.b16 %v2629, %v2628
  %2646 = vmatprep.subr.bf16.mxu0 0
  %2647 = vmatpush1.bf16.msra.mxu0 %v2637
  %2648 = vmatprep.subr.bf16.mxu0 0
  %2649 = vmatpush1.bf16.msra.mxu0 %v2636
  %2650 = vmatprep.subr.bf16.mxu0 0
  %2651 = vmatpush1.bf16.msra.mxu0 %v2635
  %2652 = vmatprep.subr.bf16.mxu0 0
  %2653 = vmatpush1.bf16.msra.mxu0 %v2634
  %2654 = vmatprep.subr.bf16.mxu0 0
  %2655 = vmatpush1.bf16.msra.mxu0 %v2633
  %2656 = vmatprep.subr.bf16.mxu0 0
  %2657 = vmatpush1.bf16.msra.mxu0 %v2632
  %2658 = vmatprep.subr.bf16.mxu0 0
  %2659 = vmatpush1.bf16.msra.mxu0 %v2631
  %2660 = vmatprep.subr.bf16.mxu0 0
  %2661 = vmatpush1.bf16.msra.mxu0 %v2630
  %2662 = vmatprep.subr.bf16.mxu0 0
  %2663 = vmatpush2.bf16.msra.mxu0 0
  %2664 = vmatprep.subr.bf16.mxu0 0
  %2665 = vmatpush2.bf16.msra.mxu0 0
  %2666 = vmatprep.subr.bf16.mxu0 0
  %2667 = vmatpush2.bf16.msra.mxu0 0
  %2668 = vmatprep.subr.bf16.mxu0 0
  %2669 = vmatpush2.bf16.msra.mxu0 0
  %2670 = vmatprep.subr.bf16.mxu0 0
  %2671 = vmatpush2.bf16.msra.mxu0 0
  %2672 = vmatprep.subr.bf16.mxu0 0
  %2673 = vmatpush2.bf16.msra.mxu0 0
  %2674 = vmatprep.subr.bf16.mxu0 0
  %2675 = vmatpush2.bf16.msra.mxu0 0
  %2676 = vmatprep.subr.bf16.mxu0 0
  %2677 = vmatpush2.bf16.msra.mxu0 0
  %2678 = vmatprep.mubr.bf16.mxu0 0
  %2679 = vmatmul.mubr.bf16.gmra.mxu0 %v2573
  %v2680 = vpop.f32.mrf.mxu0
  %v2681 = vadd.f32 %v2596, %v2680
  %v2682 = vpop.f32.mrf.mxu0
  %v2683 = vpop.f32.mrf.mxu0
  %v2684 = vadd.f32 %v2596, %v2683
  %v2685 = vpop.f32.mrf.mxu0
  %2686 = vmatprep.mubr.bf16.mxu0 0
  %2687 = vmatmul.mubr.bf16.gmra.mxu0 %v2574
  %v2688 = vpop.f32.mrf.mxu0
  %v2689 = vadd.f32 %v2596, %v2688
  %v2690 = vpop.f32.mrf.mxu0
  %v2691 = vpop.f32.mrf.mxu0
  %v2692 = vadd.f32 %v2596, %v2691
  %v2693 = vpop.f32.mrf.mxu0
  %2694 = vdwg.mxu0
  %v2695 = vlaneseq
  %v2696 = vand.u32 %v2695, 127
  %vm2697 = vcmp.lt.s32.totalorder %v2696, 5
  %vm2698 = vcmp.ge.s32.totalorder %v2696, 5
  %vm2699 = vcmp.lt.s32.totalorder %v2696, 55
  %vm2700 = vmand %vm2698, %vm2699
  %vm2701 = vcmp.ge.s32.totalorder %v2696, 55
  %vm2702 = vcmp.lt.s32.totalorder %v2696, 60
  %vm2703 = vmand %vm2701, %vm2702
  %v2704 = vsel %vm2697, %v2681, -inf
  %v2705 = vsel %vm2697, %v2684, -inf
  %v2706 = vsel %vm2697, %v2689, -inf
  %v2707 = vsel %vm2697, %v2692, -inf
  %2708 = vmax.xlane.f32.xlu0 %v2704
  %v2709 = vpop.xlane.xlu0 %2708
  %2710 = vmax.xlane.f32.xlu0 %v2705
  %v2711 = vpop.xlane.xlu0 %2710
  %2712 = vmax.xlane.f32.xlu0 %v2706
  %v2713 = vpop.xlane.xlu0 %2712
  %2714 = vmax.xlane.f32.xlu0 %v2707
  %v2715 = vpop.xlane.xlu0 %2714
  %v2716 = vsub.f32 %v2704, %v2709
  %v2717 = vsub.f32 %v2705, %v2711
  %v2718 = vsub.f32 %v2706, %v2713
  %v2719 = vsub.f32 %v2707, %v2715
  %v2720 = vmul.f32 %v2716, 1.442695
  %v2721 = vpow.pop %v2720
  %v2722 = vmul.f32 %v2717, 1.442695
  %v2723 = vpow.pop %v2722
  %v2724 = vmul.f32 %v2718, 1.442695
  %v2725 = vpow.pop %v2724
  %v2726 = vmul.f32 %v2719, 1.442695
  %v2727 = vpow.pop %v2726
  %v2728 = vsel %vm2697, %v2721, 0.0
  %v2729 = vsel %vm2697, %v2723, 0.0
  %v2730 = vsel %vm2697, %v2725, 0.0
  %v2731 = vsel %vm2697, %v2727, 0.0
  %2732 = vadd.xlane.f32.xlu0 %v2728
  %v2733 = vpop.xlane.xlu0 %2732
  %2734 = vadd.xlane.f32.xlu0 %v2729
  %v2735 = vpop.xlane.xlu0 %2734
  %2736 = vadd.xlane.f32.xlu0 %v2730
  %v2737 = vpop.xlane.xlu0 %2736
  %2738 = vadd.xlane.f32.xlu0 %v2731
  %v2739 = vpop.xlane.xlu0 %2738
  %v2740 = vrcp.pop %v2733
  %v2741 = vmul.f32 %v2728, %v2740
  %v2742 = vrcp.pop %v2735
  %v2743 = vmul.f32 %v2729, %v2742
  %v2744 = vrcp.pop %v2737
  %v2745 = vmul.f32 %v2730, %v2744
  %v2746 = vrcp.pop %v2739
  %v2747 = vmul.f32 %v2731, %v2746
  %v2748 = vsel %vm2703, %v2681, 0.0
  %v2749 = vsel %vm2703, %v2684, 0.0
  %v2750 = vsel %vm2703, %v2689, 0.0
  %v2751 = vsel %vm2703, %v2692, 0.0
  %v2752 = vxor.u32 %v2748, 2147483648
  %v2753 = vxor.u32 %v2749, 2147483648
  %v2754 = vxor.u32 %v2750, 2147483648
  %v2755 = vxor.u32 %v2751, 2147483648
  %v2756 = vmul.f32 %v2752, 1.442695
  %v2757 = vpow.pop %v2756
  %v2758 = vmul.f32 %v2753, 1.442695
  %v2759 = vpow.pop %v2758
  %v2760 = vmul.f32 %v2754, 1.442695
  %v2761 = vpow.pop %v2760
  %v2762 = vmul.f32 %v2755, 1.442695
  %v2763 = vpow.pop %v2762
  %v2764 = vadd.f32 %v2757, 1.0
  %v2765 = vadd.f32 %v2759, 1.0
  %v2766 = vadd.f32 %v2761, 1.0
  %v2767 = vadd.f32 %v2763, 1.0
  %v2768 = vrcp.pop %v2764
  %v2769 = vmul.f32 1.0, %v2768
  %v2770 = vrcp.pop %v2765
  %v2771 = vmul.f32 1.0, %v2770
  %v2772 = vrcp.pop %v2766
  %v2773 = vmul.f32 1.0, %v2772
  %v2774 = vrcp.pop %v2767
  %v2775 = vmul.f32 1.0, %v2774
  %v2776 = vmul.f32 %v2769, 9.9999
  %v2777 = vmul.f32 %v2771, 9.9999
  %v2778 = vmul.f32 %v2773, 9.9999
  %v2779 = vmul.f32 %v2775, 9.9999
  %v2780 = vadd.f32 %v2776, 0.0001
  %v2781 = vadd.f32 %v2777, 0.0001
  %v2782 = vadd.f32 %v2778, 0.0001
  %v2783 = vadd.f32 %v2779, 0.0001
  %v2784 = vsel %vm2700, %v2681, 0.0
  %v2785 = vsel %vm2700, %v2684, 0.0
  %v2786 = vsel %vm2700, %v2689, 0.0
  %v2787 = vsel %vm2700, %v2692, 0.0
  %v2788 = vsel %vm2703, %v2780, %v2784
  %v2789 = vsel %vm2703, %v2781, %v2785
  %v2790 = vsel %vm2703, %v2782, %v2786
  %v2791 = vsel %vm2703, %v2783, %v2787
  %v2792 = vsel %vm2697, %v2741, %v2788
  %v2793 = vsel %vm2697, %v2743, %v2789
  %v2794 = vsel %vm2697, %v2745, %v2790
  %v2795 = vsel %vm2697, %v2747, %v2791
  %2796 = vst [vmem:[%s5] sm:$0xff] %v2792
  %2797 = vst [vmem:[%s5 + $0x8] sm:$0xff] %v2793
  %2798 = vst [vmem:[%s5 + $0x10] sm:$0xff] %v2794
  %2799 = vst [vmem:[%s5 + $0x18] sm:$0xff] %v2795
  // Predicated region
  $region22: #{mln_cnn_forward.1} parent=0 // pred_check
    _
  $region23: #{mln_cnn_forward.1} parent=0 // pred_check_branch
    %2801 = sbr.rel (0) target = $region25
  $region24: #{mln_cnn_forward.1} parent=0 // pred_region
    _
  $region25: #{mln_cnn_forward.1} parent=0 // pred_fallthru
    _
  // Predicated region
  $region26: #{mln_cnn_forward.1} parent=0 // pred_check
    _
  $region27: #{mln_cnn_forward.1} parent=0 // pred_check_branch
    %2803 = sbr.rel (0) target = $region29
  $region28: #{mln_cnn_forward.1} parent=0 // pred_region
    _
  $region29: #{mln_cnn_forward.1} parent=0 // pred_fallthru
    _

</llo_original>
